<compile_context>
chip_gen: v5e
topology: v5e:2x2
jax: 0.10.0
libtpu: 0.0.40
codegen_flags: <defaults>
</compile_context>

<pallas_src>
import numpy as np
import jax
import jax.numpy as jnp
from jax.experimental import pallas as pl
from jax.experimental.pallas import tpu as pltpu


# ---------------------------------------------------------------------------
# beta schedule (pure numpy setup glue, identical to the PyTorch reference)
# ---------------------------------------------------------------------------
def get_beta_schedule(beta_schedule, *, beta_start, beta_end, num_diffusion_timesteps):
    def sigmoid(x):
        return 1 / (np.exp(-x) + 1)

    if beta_schedule == 'quad':
        betas = np.linspace(beta_start ** 0.5, beta_end ** 0.5,
                            num_diffusion_timesteps, dtype=np.float64) ** 2
    elif beta_schedule == 'linear':
        betas = np.linspace(beta_start, beta_end,
                            num_diffusion_timesteps, dtype=np.float64)
    elif beta_schedule == 'const':
        betas = beta_end * np.ones(num_diffusion_timesteps, dtype=np.float64)
    elif beta_schedule == 'jsd':
        betas = 1.0 / np.linspace(num_diffusion_timesteps, 1,
                                  num_diffusion_timesteps, dtype=np.float64)
    elif beta_schedule == 'sigmoid':
        betas = np.linspace(-6, 6, num_diffusion_timesteps)
        betas = sigmoid(betas) * (beta_end - beta_start) + beta_start
    else:
        raise NotImplementedError(beta_schedule)
    assert betas.shape == (num_diffusion_timesteps,)
    return betas


_BN_EPS = 1e-5


def _round_up(x, m):
    return ((x + m - 1) // m) * m


# ---------------------------------------------------------------------------
# One-time parameter preparation (hoisted out of the per-step forward path)
# ---------------------------------------------------------------------------
def prepare_params(raw, e_zf, e_xf, betas_np, *, t=1, bn_eps=_BN_EPS):
    """Folds BN into the 1x1 convs, casts MXU weights to bf16, splits the fuse
    conv weight (concat-free), pads e_zf to a lane-dense Nz and computes the
    diffusion scale constants in numpy.

    e_zf: (1, Nz, C), e_xf: (1, Nx, C)  -- learned noise Parameters, already
    converted from NCHW to the (1, H*W, C) layout used by the kernel.
    """
    f32 = jnp.float32
    C = raw['wq'].shape[0]
    nz = e_zf.shape[1]
    nz_pad = max(128, _round_up(nz, 128))

    # a = (1 - betas).cumprod()[t], t = 1   (matches index_select(0, t=1))
    a = float(np.cumprod(1.0 - np.asarray(betas_np, np.float64))[t])
    sqrt_a = float(np.sqrt(a))
    sqrt_1ma = float(np.sqrt(1.0 - a))

    def fold_bn(w, b, gamma, beta, mean, var):
        # y = gamma*(Wx + b - mean)/sqrt(var+eps) + beta
        scale = (gamma.astype(f32) / jnp.sqrt(var.astype(f32) + bn_eps))
        w_f = w.astype(f32) * scale[None, :]
        b_f = (b.astype(f32) - mean.astype(f32)) * scale + beta.astype(f32)
        return w_f, b_f.reshape(1, -1)

    wg_f, bg_f = fold_bn(raw['wg'], raw['bg'], raw['g_gamma'], raw['g_beta'],
                         raw['g_mean'], raw['g_var'])
    wfi_f, bfi_f = fold_bn(raw['wfi'], raw['bfi'], raw['fi_gamma'], raw['fi_beta'],
                           raw['fi_mean'], raw['fi_var'])

    e_zf_pad = jnp.pad(e_zf.astype(f32), ((0, 0), (0, nz_pad - nz), (0, 0)))

    return dict(
        sqrt_a=sqrt_a, nz=nz, nz_pad=nz_pad, c=C,
        # noise parameters pre-scaled by sqrt(1 - alpha_bar_t)
        e_zf=e_zf_pad * sqrt_1ma,
        e_xf=e_xf.astype(f32) * sqrt_1ma,
        wq=raw['wq'].astype(jnp.bfloat16), bq=raw['bq'].reshape(1, -1).astype(f32),
        ws=raw['ws'].astype(jnp.bfloat16), bs=raw['bs'].reshape(1, -1).astype(f32),
        wg=wg_f.astype(jnp.bfloat16), bg=bg_f,
        wfi_e=wfi_f[:C].astype(jnp.bfloat16),     # concat-free fuse conv
        wfi_x=wfi_f[C:].astype(jnp.bfloat16),
        bfi=bfi_f,
    )


# ---------------------------------------------------------------------------
# Fused kernel: diffusion forward-noising (zf & xf) + Graph_Attention_Union
# One grid step == one batch element; all refs are 2-D (batch dim squeezed).
# ---------------------------------------------------------------------------
def _make_fused_kernel(sqrt_a, nz_valid, nz_pad):
    needs_mask = (nz_pad != nz_valid)

    def kernel(zf_ref, xf_ref, e_zf_ref, e_xf_ref,
               wq_ref, bq_ref, ws_ref, bs_ref, wg_ref, bg_ref,
               wfi_e_ref, wfi_x_ref, bfi_ref,
               feat_ref, xz_ref, xx_ref):
        # ---- diffusion forward-noising (e_* already scaled by sqrt(1-a)) ----
        x_z = zf_ref[...] * sqrt_a + e_zf_ref[...]          # (Nz_pad, C) f32
        x_x = xf_ref[...] * sqrt_a + e_xf_ref[...]          # (Nx,     C) f32
        xz_ref[...] = x_z.astype(xz_ref.dtype)
        xx_ref[...] = x_x.astype(xx_ref.dtype)

        # TODO(synk): runner.sample (DDIM sampler + UNet) and align_track are
        #             external; the noised features feed the attention directly.
        zb = x_z.astype(jnp.bfloat16)
        xb = x_x.astype(jnp.bfloat16)

        def conv1x1(x_bf16, w_ref, b_ref):
            # channels-last 1x1 conv == 2-D matmul (bf16 in, f32 accumulate)
            return jnp.dot(x_bf16, w_ref[...],
                           preferred_element_type=jnp.float32) + b_ref[...]

        # conv outputs go straight to bf16 (their only consumer is the MXU)
        xf_trans = conv1x1(xb, wq_ref, bq_ref).astype(jnp.bfloat16)            # query(xf)
        zf_trans = conv1x1(zb, ws_ref, bs_ref).astype(jnp.bfloat16)            # support(zf)
        xf_g = jnp.maximum(conv1x1(xb, wg_ref, bg_ref), 0.0).astype(jnp.bfloat16)  # g(xf), BN folded
        zf_g = jnp.maximum(conv1x1(zb, wg_ref, bg_ref), 0.0).astype(jnp.bfloat16)  # g(zf), BN folded

        # similar = xf_trans_plain @ zf_trans_plain^T  -> (Nx, Nz_pad)
        similar = jnp.einsum('qc,kc->qk', xf_trans, zf_trans,
                             preferred_element_type=jnp.float32)
        if needs_mask:
            col = jax.lax.broadcasted_iota(jnp.int32, similar.shape, 1)
            similar = jnp.where(col < nz_valid, similar, -jnp.inf)

        # softmax(dim=-1); normalization deferred past the embedding matmul
        m = jnp.max(similar, axis=-1, keepdims=True)
        p = jnp.exp(similar - m)
        denom = jnp.sum(p, axis=-1, keepdims=True)
        emb = jnp.dot(p.astype(jnp.bfloat16), zf_g,
                      preferred_element_type=jnp.float32)                      # (Nx, C)
        emb = emb * pl.reciprocal(denom, approx=True)

        # fuse conv on concat([embedding, xf_g], ch) without the concat:
        #   cat @ wfi == emb @ wfi[:C] + xf_g @ wfi[C:]
        fused = (jnp.dot(emb.astype(jnp.bfloat16), wfi_e_ref[...],
                         preferred_element_type=jnp.float32)
                 + jnp.dot(xf_g, wfi_x_ref[...],
                           preferred_element_type=jnp.float32)
                 + bfi_ref[...])
        feat_ref[...] = jnp.maximum(fused, 0.0).astype(feat_ref.dtype)

    return kernel


def model_builder_forward(zf, xf, prepared, *, out_dtype=jnp.bfloat16):
    """zf: (B, Nz, C), xf: (B, Nx, C) backbone features, channels-last.
    Returns (features (B, Nx, Cout), x_z (B, Nz, C), x_x (B, Nx, C))."""
    B, Nz, C = zf.shape
    _, Nx, _ = xf.shape
    Cout = prepared['wfi_e'].shape[1]
    nz_pad = prepared['nz_pad']
    assert Nz == prepared['nz'] and C == prepared['c']

    if nz_pad != Nz:
        zf = jnp.pad(zf, ((0, 0), (0, nz_pad - Nz), (0, 0)))   # lane-dense keys

    kernel = _make_fused_kernel(prepared['sqrt_a'], Nz, nz_pad)

    # activations stream one batch element per grid step (batch dim squeezed);
    # weights stay resident via constant index_maps.
    vspec = lambda n, c: pl.BlockSpec((None, n, c), lambda b: (b, 0, 0))
    bspec = lambda n, c: pl.BlockSpec((None, n, c), lambda b: (0, 0, 0))
    wspec = lambda r, c: pl.BlockSpec((r, c), lambda b: (0, 0))

    grid_spec = pltpu.PrefetchScalarGridSpec(
        num_scalar_prefetch=0,
        grid=(B,),
        in_specs=[
            vspec(nz_pad, C),            # zf (padded)
            vspec(Nx, C),                # xf
            bspec(nz_pad, C),            # e_zf * sqrt(1-a)  (batch-broadcast)
            bspec(Nx, C),                # e_xf * sqrt(1-a)
            wspec(C, C), wspec(1, C),    # wq, bq
            wspec(C, C), wspec(1, C),    # ws, bs
            wspec(C, C), wspec(1, C),    # wg, bg (BN folded)
            wspec(C, Cout),              # wfi[:C]  (embedding half)
            wspec(C, Cout),              # wfi[C:]  (xf_g half)
            wspec(1, Cout),              # bfi (BN folded)
        ],
        out_specs=(
            vspec(Nx, Cout),             # features
            vspec(nz_pad, C),            # x_z (noised template)
            vspec(Nx, C),                # x_x (noised search)
        ),
    )

    features, x_z, x_x = pl.pallas_call(
        kernel,
        grid_spec=grid_spec,
        out_shape=(jax.ShapeDtypeStruct((B, Nx, Cout), out_dtype),
                   jax.ShapeDtypeStruct((B, nz_pad, C), out_dtype),
                   jax.ShapeDtypeStruct((B, Nx, C), out_dtype)),
        compiler_params=pltpu.CompilerParams(
            dimension_semantics=("parallel",)),
    )(zf, xf, prepared['e_zf'], prepared['e_xf'],
      prepared['wq'], prepared['bq'], prepared['ws'], prepared['bs'],
      prepared['wg'], prepared['bg'],
      prepared['wfi_e'], prepared['wfi_x'], prepared['bfi'])

    return features, x_z[:, :Nz], x_x


# ---------------------------------------------------------------------------
# ModelBuilder.log_softmax  (2-way log-softmax over the class pair)
#   kernel layout: (B, 2, A*H*W)  -- lane-dense last dim, row-wise stores
# ---------------------------------------------------------------------------
def _log_softmax_kernel(cls_ref, out_ref):
    x0 = cls_ref[:, 0, :]
    x1 = cls_ref[:, 1, :]
    m = jnp.maximum(x0, x1)
    lse = m + jnp.log(jnp.exp(x0 - m) + jnp.exp(x1 - m))
    out_ref[:, 0, :] = x0 - lse
    out_ref[:, 1, :] = x1 - lse


def log_softmax(cls_nchw):
    # cls: (B, 2*A, H, W) NCHW -> (B, A, H, W, 2) log-probabilities
    b, a2, h, w = cls_nchw.shape
    a = a2 // 2
    x = cls_nchw.reshape(b, 2, a * h * w)            # lane-dense layout
    y = pl.pallas_call(
        _log_softmax_kernel,
        out_shape=jax.ShapeDtypeStruct(x.shape, x.dtype),
        in_specs=[pl.BlockSpec(memory_space=pltpu.MemorySpace.VMEM)],
        out_specs=pl.BlockSpec(memory_space=pltpu.MemorySpace.VMEM),
    )(x)
    # matches cls.view(b,2,a,h,w).permute(0,2,3,4,1)   (layout glue in XLA)
    return y.reshape(b, 2, a, h, w).transpose(0, 2, 3, 4, 1)


# ---------------------------------------------------------------------------
if __name__ == "__main__":
    key = jax.random.PRNGKey(0)
    keys = jax.random.split(key, 24)

    # small shapes consistent with the module (orig: C=256, zf 13x13, xf 25x25)
    B, C, Cout = 2, 32, 32
    Hz = Wz = 8
    Hx = Wx = 12
    Nz, Nx = Hz * Wz, Hx * Wx

    # backbone features (stand-ins) and the learned noise parameters e_zf/e_xf
    zf = jax.random.normal(keys[0], (B, Nz, C), jnp.float32)
    xf = jax.random.normal(keys[1], (B, Nx, C), jnp.float32)
    e_zf = jax.random.normal(keys[2], (1, Nz, C), jnp.float32)   # ~ Parameter(randn(1,256,13,13))
    e_xf = jax.random.normal(keys[3], (1, Nx, C), jnp.float32)   # ~ Parameter(randn(1,256,25,25))

    def w(k, shape, s=0.05):
        return s * jax.random.normal(k, shape, jnp.float32)

    # Graph_Attention_Union parameters (1x1 conv weights stored as (Cin, Cout))
    raw = dict(
        wq=w(keys[4], (C, C)),   bq=w(keys[5], (C,)),
        ws=w(keys[6], (C, C)),   bs=w(keys[7], (C,)),
        wg=w(keys[8], (C, C)),   bg=w(keys[9], (C,)),
        g_gamma=1.0 + w(keys[10], (C,)),  g_beta=w(keys[11], (C,)),
        g_mean=w(keys[12], (C,)),         g_var=1.0 + jnp.abs(w(keys[13], (C,))),
        wfi=w(keys[14], (2 * C, Cout)),   bfi=w(keys[15], (Cout,)),
        fi_gamma=1.0 + w(keys[16], (Cout,)), fi_beta=w(keys[17], (Cout,)),
        fi_mean=w(keys[18], (Cout,)),        fi_var=1.0 + jnp.abs(w(keys[19], (Cout,))),
    )

    betas = get_beta_schedule('linear', beta_start=1e-4, beta_end=2e-2,
                              num_diffusion_timesteps=100)

    prepared = prepare_params(raw, e_zf, e_xf, betas)

    features, zf_noised, xf_noised = model_builder_forward(zf, xf, prepared)

    # TODO(synk): CARHead is external; apply the module's log_softmax to a
    #             stand-in cls map (B, 2, Hx, Wx) to exercise that kernel.
    cls_standin = jax.random.normal(keys[20], (B, 2, Hx, Wx), jnp.float32)
    cls_ls = log_softmax(cls_standin)

    jax.block_until_ready((features, zf_noised, xf_noised, cls_ls))

    assert features.shape == (B, Nx, Cout)
    assert zf_noised.shape == (B, Nz, C)
    assert xf_noised.shape == (B, Nx, C)
    assert cls_ls.shape == (B, 1, Hx, Wx, 2)
    print("KERNEL_OK")
</pallas_src>

<mosaic_0001>
module attributes {stable_mosaic.version = 11 : i64} {
  func.func @kernel(%arg0: i32, %arg1: memref<1x128x32xf32, #tpu.memory_space<vmem>>, %arg2: memref<1x144x32xf32, #tpu.memory_space<vmem>>, %arg3: memref<1x128x32xf32, #tpu.memory_space<vmem>>, %arg4: memref<1x144x32xf32, #tpu.memory_space<vmem>>, %arg5: memref<32x32xbf16, #tpu.memory_space<vmem>>, %arg6: memref<1x32xf32, #tpu.memory_space<vmem>>, %arg7: memref<32x32xbf16, #tpu.memory_space<vmem>>, %arg8: memref<1x32xf32, #tpu.memory_space<vmem>>, %arg9: memref<32x32xbf16, #tpu.memory_space<vmem>>, %arg10: memref<1x32xf32, #tpu.memory_space<vmem>>, %arg11: memref<32x32xbf16, #tpu.memory_space<vmem>>, %arg12: memref<32x32xbf16, #tpu.memory_space<vmem>>, %arg13: memref<1x32xf32, #tpu.memory_space<vmem>>, %arg14: memref<1x144x32xbf16, #tpu.memory_space<vmem>>, %arg15: memref<1x128x32xbf16, #tpu.memory_space<vmem>>, %arg16: memref<1x144x32xbf16, #tpu.memory_space<vmem>>) attributes {dimension_semantics = [#tpu.dimension_semantics<parallel>], iteration_bounds = array<i64: 2>, scalar_prefetch = 0 : i64, scratch_operands = 0 : i64, tpu.core_type = #tpu.core_type<tc>, window_params = [{transform_indices = @transform_0, window_bounds = array<i64: 1, 128, 32>}, {transform_indices = @transform_1, window_bounds = array<i64: 1, 144, 32>}, {pipeline_mode = #tpu.pipeline_mode<synchronous>, transform_indices = @transform_2, window_bounds = array<i64: 1, 128, 32>}, {pipeline_mode = #tpu.pipeline_mode<synchronous>, transform_indices = @transform_3, window_bounds = array<i64: 1, 144, 32>}, {pipeline_mode = #tpu.pipeline_mode<synchronous>, transform_indices = @transform_4, window_bounds = array<i64: 32, 32>}, {pipeline_mode = #tpu.pipeline_mode<synchronous>, transform_indices = @transform_5, window_bounds = array<i64: 1, 32>}, {pipeline_mode = #tpu.pipeline_mode<synchronous>, transform_indices = @transform_6, window_bounds = array<i64: 32, 32>}, {pipeline_mode = #tpu.pipeline_mode<synchronous>, transform_indices = @transform_7, window_bounds = array<i64: 1, 32>}, {pipeline_mode = #tpu.pipeline_mode<synchronous>, transform_indices = @transform_8, window_bounds = array<i64: 32, 32>}, {pipeline_mode = #tpu.pipeline_mode<synchronous>, transform_indices = @transform_9, window_bounds = array<i64: 1, 32>}, {pipeline_mode = #tpu.pipeline_mode<synchronous>, transform_indices = @transform_10, window_bounds = array<i64: 32, 32>}, {pipeline_mode = #tpu.pipeline_mode<synchronous>, transform_indices = @transform_11, window_bounds = array<i64: 32, 32>}, {pipeline_mode = #tpu.pipeline_mode<synchronous>, transform_indices = @transform_12, window_bounds = array<i64: 1, 32>}, {transform_indices = @transform_13, window_bounds = array<i64: 1, 144, 32>}, {transform_indices = @transform_14, window_bounds = array<i64: 1, 128, 32>}, {transform_indices = @transform_15, window_bounds = array<i64: 1, 144, 32>}]} {
    %c0 = arith.constant 0 : index
    %c0_0 = arith.constant 0 : index
    %c0_1 = arith.constant 0 : index
    %0 = vector.load %arg1[%c0, %c0_0, %c0_1] : memref<1x128x32xf32, #tpu.memory_space<vmem>>, vector<1x128x32xf32>
    %1 = vector.shape_cast %0 : vector<1x128x32xf32> to vector<128x32xf32>
    %cst = arith.constant 0.999799489 : f32
    %2 = vector.broadcast %cst : f32 to vector<128x32xf32>
    %3 = arith.mulf %1, %2 : vector<128x32xf32>
    %c0_2 = arith.constant 0 : index
    %c0_3 = arith.constant 0 : index
    %c0_4 = arith.constant 0 : index
    %4 = vector.load %arg3[%c0_2, %c0_3, %c0_4] : memref<1x128x32xf32, #tpu.memory_space<vmem>>, vector<1x128x32xf32>
    %5 = vector.shape_cast %4 : vector<1x128x32xf32> to vector<128x32xf32>
    %6 = arith.addf %3, %5 : vector<128x32xf32>
    %c0_5 = arith.constant 0 : index
    %c0_6 = arith.constant 0 : index
    %c0_7 = arith.constant 0 : index
    %7 = vector.load %arg2[%c0_5, %c0_6, %c0_7] : memref<1x144x32xf32, #tpu.memory_space<vmem>>, vector<1x144x32xf32>
    %8 = vector.shape_cast %7 : vector<1x144x32xf32> to vector<144x32xf32>
    %cst_8 = arith.constant 0.999799489 : f32
    %9 = vector.broadcast %cst_8 : f32 to vector<144x32xf32>
    %10 = arith.mulf %8, %9 : vector<144x32xf32>
    %c0_9 = arith.constant 0 : index
    %c0_10 = arith.constant 0 : index
    %c0_11 = arith.constant 0 : index
    %11 = vector.load %arg4[%c0_9, %c0_10, %c0_11] : memref<1x144x32xf32, #tpu.memory_space<vmem>>, vector<1x144x32xf32>
    %12 = vector.shape_cast %11 : vector<1x144x32xf32> to vector<144x32xf32>
    %13 = arith.addf %10, %12 : vector<144x32xf32>
    %14 = arith.truncf %6 : vector<128x32xf32> to vector<128x32xbf16>
    %c0_12 = arith.constant 0 : index
    %c0_13 = arith.constant 0 : index
    %c0_14 = arith.constant 0 : index
    %15 = vector.load %arg15[%c0_12, %c0_13, %c0_14] : memref<1x128x32xbf16, #tpu.memory_space<vmem>>, vector<1x128x32xbf16>
    %16 = vector.shape_cast %15 : vector<1x128x32xbf16> to vector<128x32xbf16>
    %17 = vector.shape_cast %14 : vector<128x32xbf16> to vector<1x128x32xbf16>
    tpu.vector_store %arg15[%c0_12, %c0_13, %c0_14], %17 {strides = array<i32>} : memref<1x128x32xbf16, #tpu.memory_space<vmem>>, vector<1x128x32xbf16>,
    %18 = arith.truncf %13 : vector<144x32xf32> to vector<144x32xbf16>
    %c0_15 = arith.constant 0 : index
    %c0_16 = arith.constant 0 : index
    %c0_17 = arith.constant 0 : index
    %19 = vector.load %arg16[%c0_15, %c0_16, %c0_17] : memref<1x144x32xbf16, #tpu.memory_space<vmem>>, vector<1x144x32xbf16>
    %20 = vector.shape_cast %19 : vector<1x144x32xbf16> to vector<144x32xbf16>
    %21 = vector.shape_cast %18 : vector<144x32xbf16> to vector<1x144x32xbf16>
    tpu.vector_store %arg16[%c0_15, %c0_16, %c0_17], %21 {strides = array<i32>} : memref<1x144x32xbf16, #tpu.memory_space<vmem>>, vector<1x144x32xbf16>,
    %22 = arith.truncf %6 : vector<128x32xf32> to vector<128x32xbf16>
    %23 = arith.truncf %13 : vector<144x32xf32> to vector<144x32xbf16>
    %c0_18 = arith.constant 0 : index
    %c0_19 = arith.constant 0 : index
    %24 = vector.load %arg5[%c0_18, %c0_19] : memref<32x32xbf16, #tpu.memory_space<vmem>>, vector<32x32xbf16>
    %cst_20 = arith.constant dense<0.000000e+00> : vector<144x32xf32>
    %25 = tpu.matmul %23, %24, %cst_20 {dimension_numbers = #tpu.dot_dimension_numbers<[1], [0], [0], [1], [0, 0, 1, 1], [], []>} : vector<144x32xbf16>, vector<32x32xbf16>, vector<144x32xf32> -> vector<144x32xf32>
    %c0_21 = arith.constant 0 : index
    %c0_22 = arith.constant 0 : index
    %26 = vector.load %arg6[%c0_21, %c0_22] : memref<1x32xf32, #tpu.memory_space<vmem>>, vector<1x32xf32>
    %27 = vector.broadcast %26 : vector<1x32xf32> to vector<144x32xf32>
    %28 = arith.addf %25, %27 : vector<144x32xf32>
    %29 = arith.truncf %28 : vector<144x32xf32> to vector<144x32xbf16>
    %c0_23 = arith.constant 0 : index
    %c0_24 = arith.constant 0 : index
    %30 = vector.load %arg7[%c0_23, %c0_24] : memref<32x32xbf16, #tpu.memory_space<vmem>>, vector<32x32xbf16>
    %cst_25 = arith.constant dense<0.000000e+00> : vector<128x32xf32>
    %31 = tpu.matmul %22, %30, %cst_25 {dimension_numbers = #tpu.dot_dimension_numbers<[1], [0], [0], [1], [0, 0, 1, 1], [], []>} : vector<128x32xbf16>, vector<32x32xbf16>, vector<128x32xf32> -> vector<128x32xf32>
    %c0_26 = arith.constant 0 : index
    %c0_27 = arith.constant 0 : index
    %32 = vector.load %arg8[%c0_26, %c0_27] : memref<1x32xf32, #tpu.memory_space<vmem>>, vector<1x32xf32>
    %33 = vector.broadcast %32 : vector<1x32xf32> to vector<128x32xf32>
    %34 = arith.addf %31, %33 : vector<128x32xf32>
    %35 = arith.truncf %34 : vector<128x32xf32> to vector<128x32xbf16>
    %c0_28 = arith.constant 0 : index
    %c0_29 = arith.constant 0 : index
    %36 = vector.load %arg9[%c0_28, %c0_29] : memref<32x32xbf16, #tpu.memory_space<vmem>>, vector<32x32xbf16>
    %cst_30 = arith.constant dense<0.000000e+00> : vector<144x32xf32>
    %37 = tpu.matmul %23, %36, %cst_30 {dimension_numbers = #tpu.dot_dimension_numbers<[1], [0], [0], [1], [0, 0, 1, 1], [], []>} : vector<144x32xbf16>, vector<32x32xbf16>, vector<144x32xf32> -> vector<144x32xf32>
    %c0_31 = arith.constant 0 : index
    %c0_32 = arith.constant 0 : index
    %38 = vector.load %arg10[%c0_31, %c0_32] : memref<1x32xf32, #tpu.memory_space<vmem>>, vector<1x32xf32>
    %39 = vector.broadcast %38 : vector<1x32xf32> to vector<144x32xf32>
    %40 = arith.addf %37, %39 : vector<144x32xf32>
    %cst_33 = arith.constant 0.000000e+00 : f32
    %41 = vector.broadcast %cst_33 : f32 to vector<144x32xf32>
    %42 = arith.maximumf %40, %41 : vector<144x32xf32>
    %43 = arith.truncf %42 : vector<144x32xf32> to vector<144x32xbf16>
    %c0_34 = arith.constant 0 : index
    %c0_35 = arith.constant 0 : index
    %44 = vector.load %arg9[%c0_34, %c0_35] : memref<32x32xbf16, #tpu.memory_space<vmem>>, vector<32x32xbf16>
    %cst_36 = arith.constant dense<0.000000e+00> : vector<128x32xf32>
    %45 = tpu.matmul %22, %44, %cst_36 {dimension_numbers = #tpu.dot_dimension_numbers<[1], [0], [0], [1], [0, 0, 1, 1], [], []>} : vector<128x32xbf16>, vector<32x32xbf16>, vector<128x32xf32> -> vector<128x32xf32>
    %c0_37 = arith.constant 0 : index
    %c0_38 = arith.constant 0 : index
    %46 = vector.load %arg10[%c0_37, %c0_38] : memref<1x32xf32, #tpu.memory_space<vmem>>, vector<1x32xf32>
    %47 = vector.broadcast %46 : vector<1x32xf32> to vector<128x32xf32>
    %48 = arith.addf %45, %47 : vector<128x32xf32>
    %cst_39 = arith.constant 0.000000e+00 : f32
    %49 = vector.broadcast %cst_39 : f32 to vector<128x32xf32>
    %50 = arith.maximumf %48, %49 : vector<128x32xf32>
    %51 = arith.truncf %50 : vector<128x32xf32> to vector<128x32xbf16>
    "tpu.trace_start"() <{level = 10 : i32, message = "qc,kc->qk"}> : () -> ()
    %cst_40 = arith.constant dense<0.000000e+00> : vector<144x128xf32>
    %52 = tpu.matmul %29, %35, %cst_40 {dimension_numbers = #tpu.dot_dimension_numbers<[1], [1], [0], [0], [0, 0, 1, 0], [], []>} : vector<144x32xbf16>, vector<128x32xbf16>, vector<144x128xf32> -> vector<144x128xf32>
    "tpu.trace_stop"() : () -> ()
    %53 = tpu.iota {dimensions = array<i32: 1>} : vector<144x128xi32>
    %c64_i32 = arith.constant 64 : i32
    %54 = vector.broadcast %c64_i32 : i32 to vector<144x128xi32>
    %55 = arith.cmpi slt, %53, %54 : vector<144x128xi32>
    %cst_41 = arith.constant 0xFF800000 : f32
    %56 = vector.broadcast %cst_41 : f32 to vector<144x128xf32>
    %57 = arith.select %55, %52, %56 : vector<144x128xi1>, vector<144x128xf32>
    %cst_42 = arith.constant dense<0xFF800000> : vector<144xf32>
    %58 = vector.multi_reduction <maximumf>, %57, %cst_42 [1] : vector<144x128xf32> to vector<144xf32>
    %59 = vector.shape_cast %58 : vector<144xf32> to vector<144x1xf32>
    %60 = vector.broadcast %59 : vector<144x1xf32> to vector<144x128xf32>
    %61 = arith.subf %57, %60 : vector<144x128xf32>
    %62 = math.exp %61 : vector<144x128xf32>
    %cst_43 = arith.constant dense<0.000000e+00> : vector<144xf32>
    %63 = vector.multi_reduction <add>, %62, %cst_43 [1] : vector<144x128xf32> to vector<144xf32>
    %64 = vector.shape_cast %63 : vector<144xf32> to vector<144x1xf32>
    %65 = arith.truncf %62 : vector<144x128xf32> to vector<144x128xbf16>
    %cst_44 = arith.constant dense<0.000000e+00> : vector<144x32xf32>
    %66 = tpu.matmul %65, %51, %cst_44 {dimension_numbers = #tpu.dot_dimension_numbers<[1], [0], [0], [1], [0, 0, 1, 1], [], []>} : vector<144x128xbf16>, vector<128x32xbf16>, vector<144x32xf32> -> vector<144x32xf32>
    %67 = tpu.reciprocal %64 {approx = true} : vector<144x1xf32> -> vector<144x1xf32>
    %68 = vector.broadcast %67 : vector<144x1xf32> to vector<144x32xf32>
    %69 = arith.mulf %66, %68 : vector<144x32xf32>
    %70 = arith.truncf %69 : vector<144x32xf32> to vector<144x32xbf16>
    %c0_45 = arith.constant 0 : index
    %c0_46 = arith.constant 0 : index
    %71 = vector.load %arg11[%c0_45, %c0_46] : memref<32x32xbf16, #tpu.memory_space<vmem>>, vector<32x32xbf16>
    %cst_47 = arith.constant dense<0.000000e+00> : vector<144x32xf32>
    %72 = tpu.matmul %70, %71, %cst_47 {dimension_numbers = #tpu.dot_dimension_numbers<[1], [0], [0], [1], [0, 0, 1, 1], [], []>} : vector<144x32xbf16>, vector<32x32xbf16>, vector<144x32xf32> -> vector<144x32xf32>
    %c0_48 = arith.constant 0 : index
    %c0_49 = arith.constant 0 : index
    %73 = vector.load %arg12[%c0_48, %c0_49] : memref<32x32xbf16, #tpu.memory_space<vmem>>, vector<32x32xbf16>
    %cst_50 = arith.constant dense<0.000000e+00> : vector<144x32xf32>
    %74 = tpu.matmul %43, %73, %cst_50 {dimension_numbers = #tpu.dot_dimension_numbers<[1], [0], [0], [1], [0, 0, 1, 1], [], []>} : vector<144x32xbf16>, vector<32x32xbf16>, vector<144x32xf32> -> vector<144x32xf32>
    %75 = arith.addf %72, %74 : vector<144x32xf32>
    %c0_51 = arith.constant 0 : index
    %c0_52 = arith.constant 0 : index
    %76 = vector.load %arg13[%c0_51, %c0_52] : memref<1x32xf32, #tpu.memory_space<vmem>>, vector<1x32xf32>
    %77 = vector.broadcast %76 : vector<1x32xf32> to vector<144x32xf32>
    %78 = arith.addf %75, %77 : vector<144x32xf32>
    %cst_53 = arith.constant 0.000000e+00 : f32
    %79 = vector.broadcast %cst_53 : f32 to vector<144x32xf32>
    %80 = arith.maximumf %78, %79 : vector<144x32xf32>
    %81 = arith.truncf %80 : vector<144x32xf32> to vector<144x32xbf16>
    %c0_54 = arith.constant 0 : index
    %c0_55 = arith.constant 0 : index
    %c0_56 = arith.constant 0 : index
    %82 = vector.load %arg14[%c0_54, %c0_55, %c0_56] : memref<1x144x32xbf16, #tpu.memory_space<vmem>>, vector<1x144x32xbf16>
    %83 = vector.shape_cast %82 : vector<1x144x32xbf16> to vector<144x32xbf16>
    %84 = vector.shape_cast %81 : vector<144x32xbf16> to vector<1x144x32xbf16>
    tpu.vector_store %arg14[%c0_54, %c0_55, %c0_56], %84 {strides = array<i32>} : memref<1x144x32xbf16, #tpu.memory_space<vmem>>, vector<1x144x32xbf16>,
    return
  }
  func.func @transform_0(%arg0: i32) -> (i32, i32, i32) {
    %c0_i32 = arith.constant 0 : i32
    %c0_i32_0 = arith.constant 0 : i32
    %c0_i32_1 = arith.constant 0 : i32
    return %arg0, %c0_i32, %c0_i32_0 : i32, i32, i32
  }
  func.func @transform_1(%arg0: i32) -> (i32, i32, i32) {
    %c0_i32 = arith.constant 0 : i32
    %c0_i32_0 = arith.constant 0 : i32
    %c0_i32_1 = arith.constant 0 : i32
    return %arg0, %c0_i32, %c0_i32_0 : i32, i32, i32
  }
  func.func @transform_2(%arg0: i32) -> (i32, i32, i32) {
    %c0_i32 = arith.constant 0 : i32
    %c0_i32_0 = arith.constant 0 : i32
    %c0_i32_1 = arith.constant 0 : i32
    %c0_i32_2 = arith.constant 0 : i32
    return %c0_i32, %c0_i32_0, %c0_i32_1 : i32, i32, i32
  }
  func.func @transform_3(%arg0: i32) -> (i32, i32, i32) {
    %c0_i32 = arith.constant 0 : i32
    %c0_i32_0 = arith.constant 0 : i32
    %c0_i32_1 = arith.constant 0 : i32
    %c0_i32_2 = arith.constant 0 : i32
    return %c0_i32, %c0_i32_0, %c0_i32_1 : i32, i32, i32
  }
  func.func @transform_4(%arg0: i32) -> (i32, i32) {
    %c0_i32 = arith.constant 0 : i32
    %c0_i32_0 = arith.constant 0 : i32
    %c0_i32_1 = arith.constant 0 : i32
    return %c0_i32, %c0_i32_0 : i32, i32
  }
  func.func @transform_5(%arg0: i32) -> (i32, i32) {
    %c0_i32 = arith.constant 0 : i32
    %c0_i32_0 = arith.constant 0 : i32
    %c0_i32_1 = arith.constant 0 : i32
    return %c0_i32, %c0_i32_0 : i32, i32
  }
  func.func @transform_6(%arg0: i32) -> (i32, i32) {
    %c0_i32 = arith.constant 0 : i32
    %c0_i32_0 = arith.constant 0 : i32
    %c0_i32_1 = arith.constant 0 : i32
    return %c0_i32, %c0_i32_0 : i32, i32
  }
  func.func @transform_7(%arg0: i32) -> (i32, i32) {
    %c0_i32 = arith.constant 0 : i32
    %c0_i32_0 = arith.constant 0 : i32
    %c0_i32_1 = arith.constant 0 : i32
    return %c0_i32, %c0_i32_0 : i32, i32
  }
  func.func @transform_8(%arg0: i32) -> (i32, i32) {
    %c0_i32 = arith.constant 0 : i32
    %c0_i32_0 = arith.constant 0 : i32
    %c0_i32_1 = arith.constant 0 : i32
    return %c0_i32, %c0_i32_0 : i32, i32
  }
  func.func @transform_9(%arg0: i32) -> (i32, i32) {
    %c0_i32 = arith.constant 0 : i32
    %c0_i32_0 = arith.constant 0 : i32
    %c0_i32_1 = arith.constant 0 : i32
    return %c0_i32, %c0_i32_0 : i32, i32
  }
  func.func @transform_10(%arg0: i32) -> (i32, i32) {
    %c0_i32 = arith.constant 0 : i32
    %c0_i32_0 = arith.constant 0 : i32
    %c0_i32_1 = arith.constant 0 : i32
    return %c0_i32, %c0_i32_0 : i32, i32
  }
  func.func @transform_11(%arg0: i32) -> (i32, i32) {
    %c0_i32 = arith.constant 0 : i32
    %c0_i32_0 = arith.constant 0 : i32
    %c0_i32_1 = arith.constant 0 : i32
    return %c0_i32, %c0_i32_0 : i32, i32
  }
  func.func @transform_12(%arg0: i32) -> (i32, i32) {
    %c0_i32 = arith.constant 0 : i32
    %c0_i32_0 = arith.constant 0 : i32
    %c0_i32_1 = arith.constant 0 : i32
    return %c0_i32, %c0_i32_0 : i32, i32
  }
  func.func @transform_13(%arg0: i32) -> (i32, i32, i32) {
    %c0_i32 = arith.constant 0 : i32
    %c0_i32_0 = arith.constant 0 : i32
    %c0_i32_1 = arith.constant 0 : i32
    return %arg0, %c0_i32, %c0_i32_0 : i32, i32, i32
  }
  func.func @transform_14(%arg0: i32) -> (i32, i32, i32) {
    %c0_i32 = arith.constant 0 : i32
    %c0_i32_0 = arith.constant 0 : i32
    %c0_i32_1 = arith.constant 0 : i32
    return %arg0, %c0_i32, %c0_i32_0 : i32, i32, i32
  }
  func.func @transform_15(%arg0: i32) -> (i32, i32, i32) {
    %c0_i32 = arith.constant 0 : i32
    %c0_i32_0 = arith.constant 0 : i32
    %c0_i32_1 = arith.constant 0 : i32
    return %arg0, %c0_i32, %c0_i32_0 : i32, i32, i32
  }
}

</mosaic_0001>

<llo_original>
// kernel: tpu_custom_call.1
$region0: #{tpu_custom_call.1}
  #allocation0 [shape = 'u32[]', space=smem, size = 0x4, offset = 0x4, fixed_abs, tag = 'smem constant byte address 0x4 - core index']
  #allocation1 [shape = 'u32[72,128]{1,0:T(1,128)}', space=vmem, size = 0x9000, scoped, tag = 'internal scratch']
  %s0 = inlined_call_operand.vmem [shape: f32[2,128,32], index: 0, kind: input, shape index: {}]
  %s1 = inlined_call_operand.vmem [shape: f32[2,144,32], index: 1, kind: input, shape index: {}]
  %s2 = inlined_call_operand.vmem [shape: f32[1,128,32], index: 2, kind: input, shape index: {}]
  %s3 = inlined_call_operand.vmem [shape: f32[1,144,32], index: 3, kind: input, shape index: {}]
  %s4 = inlined_call_operand.vmem [shape: bf16[32,32], index: 4, kind: input, shape index: {}]
  %s5 = inlined_call_operand.vmem [shape: f32[1,32], index: 5, kind: input, shape index: {}]
  %s6 = inlined_call_operand.vmem [shape: bf16[32,32], index: 6, kind: input, shape index: {}]
  %s7 = inlined_call_operand.vmem [shape: f32[1,32], index: 7, kind: input, shape index: {}]
  %s8 = inlined_call_operand.vmem [shape: bf16[32,32], index: 8, kind: input, shape index: {}]
  %s9 = inlined_call_operand.vmem [shape: f32[1,32], index: 9, kind: input, shape index: {}]
  %s10 = inlined_call_operand.vmem [shape: bf16[32,32], index: 10, kind: input, shape index: {}]
  %s11 = inlined_call_operand.vmem [shape: bf16[32,32], index: 11, kind: input, shape index: {}]
  %s12 = inlined_call_operand.vmem [shape: f32[1,32], index: 12, kind: input, shape index: {}]
  %s13 = inlined_call_operand.vmem [shape: bf16[2,144,32], index: 13, kind: output, shape index: {0}]
  %s14 = inlined_call_operand.vmem [shape: bf16[2,128,32], index: 14, kind: output, shape index: {1}]
  %s15 = inlined_call_operand.vmem [shape: bf16[2,144,32], index: 15, kind: output, shape index: {2}]
  %16 = xla_tuple %s13, %s14, %s15
  %s17 = sld [smem:[#allocation0]]
  $region101: #{tpu_custom_call.1} parent=0
    _
  %s19 = ssub.s32 1, %s17
  %s20 = scalar_select 0, %s19, %s17
  loop: start=0, step=1, limit=4
  $region2: #{tpu_custom_call.1} parent=0 // loop_pre_header
    _
  $region3: #{tpu_custom_call.1} parent=0 // loop_header
    %s22 = sphi 0, %s26
    %p23 = scmp.ge.s32.totalorder %s22, 4
    %s32 = sphi 0, %s34
    %s35 = sphi 0, %s32
    %s36 = sphi 0, %s35
    %s52 = sphi 0, %s36
    %s58 = sphi 0, %s60
    %s61 = sphi 0, %s58
    %s62 = sphi 0, %s61
    %s78 = sphi 0, %s62
    %s82 = sphi 0, %s82
    %s84 = sphi 0, %s82
    %s85 = sphi 0, %s84
    %s99 = sphi 0, %s85
    %s103 = sphi 0, %s103
    %s105 = sphi 0, %s103
    %s106 = sphi 0, %s105
    %s120 = sphi 0, %s106
    %s124 = sphi 0, %s124
    %s126 = sphi 0, %s124
    %s127 = sphi 0, %s126
    %s141 = sphi 0, %s127
    %s145 = sphi 0, %s145
    %s147 = sphi 0, %s145
    %s148 = sphi 0, %s147
    %s162 = sphi 0, %s148
    %s166 = sphi 0, %s166
    %s168 = sphi 0, %s166
    %s169 = sphi 0, %s168
    %s183 = sphi 0, %s169
    %s187 = sphi 0, %s187
    %s189 = sphi 0, %s187
    %s190 = sphi 0, %s189
    %s204 = sphi 0, %s190
    %s208 = sphi 0, %s208
    %s210 = sphi 0, %s208
    %s211 = sphi 0, %s210
    %s225 = sphi 0, %s211
    %s229 = sphi 0, %s229
    %s231 = sphi 0, %s229
    %s232 = sphi 0, %s231
    %s246 = sphi 0, %s232
    %s250 = sphi 0, %s250
    %s252 = sphi 0, %s250
    %s253 = sphi 0, %s252
    %s267 = sphi 0, %s253
    %s271 = sphi 0, %s271
    %s273 = sphi 0, %s271
    %s274 = sphi 0, %s273
    %s288 = sphi 0, %s274
    %s292 = sphi 0, %s292
    %s294 = sphi 0, %s292
    %s295 = sphi 0, %s294
    %s309 = sphi 0, %s295
    %s315 = sphi 0, %s317
    %s318 = sphi 0, %s315
    %s319 = sphi 0, %s318
    %s335 = sphi 0, %s319
    %s341 = sphi 0, %s343
    %s344 = sphi 0, %s341
    %s345 = sphi 0, %s344
    %s361 = sphi 0, %s345
    %s367 = sphi 0, %s369
    %s370 = sphi 0, %s367
    %s371 = sphi 0, %s370
    %s387 = sphi 0, %s371
  $region4: #{tpu_custom_call.1} parent=0 // loop_header_branch
    %25 = sbr.rel (%p23) target = $region8
  $region5: #{tpu_custom_call.1} parent=0 // loop_body
    %s27 = ssub.s32 %s22, 1
    %s28 = ssub.s32 %s22, 2
    %s29 = sadd.s32 %s22, 1
    %s30 = ssub.s32 %s22, %s29
    %p31 = scmp.eq.s32.totalorder %s30, 0
    %s33 = sadd.s32 %s32, 1
    %s34 = scalar_select %p31, %s32, %s33
    %p37 = pneg %p31
    %p38 = scmp.eq.s32.totalorder %s22, 1
    %p39 = por %p37, %p38
    %p40 = scmp.ne.s32.totalorder %s32, %s35
    %p41 = scmp.eq.s32.totalorder %s22, 0
    %p42 = por %p40, %p41
    %p43 = scmp.ne.s32.totalorder %s32, %s35
    %p44 = scmp.eq.s32.totalorder %s27, 1
    %p45 = por %p43, %p44
    %p46 = scmp.ne.s32.totalorder %s35, %s36
    %p47 = scmp.eq.s32.totalorder %s27, 0
    %p48 = por %p46, %p47
    %p49 = scmp.ne.s32.totalorder %s35, %s36
    %p50 = scmp.eq.s32.totalorder %s28, 1
    %p51 = por %p49, %p50
    %p53 = scmp.ne.s32.totalorder %s36, %s52
    %p54 = scmp.eq.s32.totalorder %s28, 0
    %p55 = por %p53, %p54
    %s56 = ssub.s32 %s22, %s29
    %p57 = scmp.eq.s32.totalorder %s56, 0
    %s59 = sadd.s32 %s58, 1
    %s60 = scalar_select %p57, %s58, %s59
    %p63 = pneg %p57
    %p64 = scmp.eq.s32.totalorder %s22, 1
    %p65 = por %p63, %p64
    %p66 = scmp.ne.s32.totalorder %s58, %s61
    %p67 = scmp.eq.s32.totalorder %s22, 0
    %p68 = por %p66, %p67
    %p69 = scmp.ne.s32.totalorder %s58, %s61
    %p70 = scmp.eq.s32.totalorder %s27, 1
    %p71 = por %p69, %p70
    %p72 = scmp.ne.s32.totalorder %s61, %s62
    %p73 = scmp.eq.s32.totalorder %s27, 0
    %p74 = por %p72, %p73
    %p75 = scmp.ne.s32.totalorder %s61, %s62
    %p76 = scmp.eq.s32.totalorder %s28, 1
    %p77 = por %p75, %p76
    %p79 = scmp.ne.s32.totalorder %s62, %s78
    %p80 = scmp.eq.s32.totalorder %s28, 0
    %p81 = por %p79, %p80
    %s83 = sadd.s32 %s82, 1
    %p86 = scmp.eq.s32.totalorder %s22, 1
    %p87 = scmp.ne.s32.totalorder %s82, %s84
    %p88 = scmp.eq.s32.totalorder %s22, 0
    %p89 = por %p87, %p88
    %p90 = scmp.ne.s32.totalorder %s82, %s84
    %p91 = scmp.eq.s32.totalorder %s27, 1
    %p92 = por %p90, %p91
    %p93 = scmp.ne.s32.totalorder %s84, %s85
    %p94 = scmp.eq.s32.totalorder %s27, 0
    %p95 = por %p93, %p94
    %p96 = scmp.ne.s32.totalorder %s84, %s85
    %p97 = scmp.eq.s32.totalorder %s28, 1
    %p98 = por %p96, %p97
    %p100 = scmp.ne.s32.totalorder %s85, %s99
    %p101 = scmp.eq.s32.totalorder %s28, 0
    %p102 = por %p100, %p101
    %s104 = sadd.s32 %s103, 1
    %p107 = scmp.eq.s32.totalorder %s22, 1
    %p108 = scmp.ne.s32.totalorder %s103, %s105
    %p109 = scmp.eq.s32.totalorder %s22, 0
    %p110 = por %p108, %p109
    %p111 = scmp.ne.s32.totalorder %s103, %s105
    %p112 = scmp.eq.s32.totalorder %s27, 1
    %p113 = por %p111, %p112
    %p114 = scmp.ne.s32.totalorder %s105, %s106
    %p115 = scmp.eq.s32.totalorder %s27, 0
    %p116 = por %p114, %p115
    %p117 = scmp.ne.s32.totalorder %s105, %s106
    %p118 = scmp.eq.s32.totalorder %s28, 1
    %p119 = por %p117, %p118
    %p121 = scmp.ne.s32.totalorder %s106, %s120
    %p122 = scmp.eq.s32.totalorder %s28, 0
    %p123 = por %p121, %p122
    %s125 = sadd.s32 %s124, 1
    %p128 = scmp.eq.s32.totalorder %s22, 1
    %p129 = scmp.ne.s32.totalorder %s124, %s126
    %p130 = scmp.eq.s32.totalorder %s22, 0
    %p131 = por %p129, %p130
    %p132 = scmp.ne.s32.totalorder %s124, %s126
    %p133 = scmp.eq.s32.totalorder %s27, 1
    %p134 = por %p132, %p133
    %p135 = scmp.ne.s32.totalorder %s126, %s127
    %p136 = scmp.eq.s32.totalorder %s27, 0
    %p137 = por %p135, %p136
    %p138 = scmp.ne.s32.totalorder %s126, %s127
    %p139 = scmp.eq.s32.totalorder %s28, 1
    %p140 = por %p138, %p139
    %p142 = scmp.ne.s32.totalorder %s127, %s141
    %p143 = scmp.eq.s32.totalorder %s28, 0
    %p144 = por %p142, %p143
    %s146 = sadd.s32 %s145, 1
    %p149 = scmp.eq.s32.totalorder %s22, 1
    %p150 = scmp.ne.s32.totalorder %s145, %s147
    %p151 = scmp.eq.s32.totalorder %s22, 0
    %p152 = por %p150, %p151
    %p153 = scmp.ne.s32.totalorder %s145, %s147
    %p154 = scmp.eq.s32.totalorder %s27, 1
    %p155 = por %p153, %p154
    %p156 = scmp.ne.s32.totalorder %s147, %s148
    %p157 = scmp.eq.s32.totalorder %s27, 0
    %p158 = por %p156, %p157
    %p159 = scmp.ne.s32.totalorder %s147, %s148
    %p160 = scmp.eq.s32.totalorder %s28, 1
    %p161 = por %p159, %p160
    %p163 = scmp.ne.s32.totalorder %s148, %s162
    %p164 = scmp.eq.s32.totalorder %s28, 0
    %p165 = por %p163, %p164
    %s167 = sadd.s32 %s166, 1
    %p170 = scmp.eq.s32.totalorder %s22, 1
    %p171 = scmp.ne.s32.totalorder %s166, %s168
    %p172 = scmp.eq.s32.totalorder %s22, 0
    %p173 = por %p171, %p172
    %p174 = scmp.ne.s32.totalorder %s166, %s168
    %p175 = scmp.eq.s32.totalorder %s27, 1
    %p176 = por %p174, %p175
    %p177 = scmp.ne.s32.totalorder %s168, %s169
    %p178 = scmp.eq.s32.totalorder %s27, 0
    %p179 = por %p177, %p178
    %p180 = scmp.ne.s32.totalorder %s168, %s169
    %p181 = scmp.eq.s32.totalorder %s28, 1
    %p182 = por %p180, %p181
    %p184 = scmp.ne.s32.totalorder %s169, %s183
    %p185 = scmp.eq.s32.totalorder %s28, 0
    %p186 = por %p184, %p185
    %s188 = sadd.s32 %s187, 1
    %p191 = scmp.eq.s32.totalorder %s22, 1
    %p192 = scmp.ne.s32.totalorder %s187, %s189
    %p193 = scmp.eq.s32.totalorder %s22, 0
    %p194 = por %p192, %p193
    %p195 = scmp.ne.s32.totalorder %s187, %s189
    %p196 = scmp.eq.s32.totalorder %s27, 1
    %p197 = por %p195, %p196
    %p198 = scmp.ne.s32.totalorder %s189, %s190
    %p199 = scmp.eq.s32.totalorder %s27, 0
    %p200 = por %p198, %p199
    %p201 = scmp.ne.s32.totalorder %s189, %s190
    %p202 = scmp.eq.s32.totalorder %s28, 1
    %p203 = por %p201, %p202
    %p205 = scmp.ne.s32.totalorder %s190, %s204
    %p206 = scmp.eq.s32.totalorder %s28, 0
    %p207 = por %p205, %p206
    %s209 = sadd.s32 %s208, 1
    %p212 = scmp.eq.s32.totalorder %s22, 1
    %p213 = scmp.ne.s32.totalorder %s208, %s210
    %p214 = scmp.eq.s32.totalorder %s22, 0
    %p215 = por %p213, %p214
    %p216 = scmp.ne.s32.totalorder %s208, %s210
    %p217 = scmp.eq.s32.totalorder %s27, 1
    %p218 = por %p216, %p217
    %p219 = scmp.ne.s32.totalorder %s210, %s211
    %p220 = scmp.eq.s32.totalorder %s27, 0
    %p221 = por %p219, %p220
    %p222 = scmp.ne.s32.totalorder %s210, %s211
    %p223 = scmp.eq.s32.totalorder %s28, 1
    %p224 = por %p222, %p223
    %p226 = scmp.ne.s32.totalorder %s211, %s225
    %p227 = scmp.eq.s32.totalorder %s28, 0
    %p228 = por %p226, %p227
    %s230 = sadd.s32 %s229, 1
    %p233 = scmp.eq.s32.totalorder %s22, 1
    %p234 = scmp.ne.s32.totalorder %s229, %s231
    %p235 = scmp.eq.s32.totalorder %s22, 0
    %p236 = por %p234, %p235
    %p237 = scmp.ne.s32.totalorder %s229, %s231
    %p238 = scmp.eq.s32.totalorder %s27, 1
    %p239 = por %p237, %p238
    %p240 = scmp.ne.s32.totalorder %s231, %s232
    %p241 = scmp.eq.s32.totalorder %s27, 0
    %p242 = por %p240, %p241
    %p243 = scmp.ne.s32.totalorder %s231, %s232
    %p244 = scmp.eq.s32.totalorder %s28, 1
    %p245 = por %p243, %p244
    %p247 = scmp.ne.s32.totalorder %s232, %s246
    %p248 = scmp.eq.s32.totalorder %s28, 0
    %p249 = por %p247, %p248
    %s251 = sadd.s32 %s250, 1
    %p254 = scmp.eq.s32.totalorder %s22, 1
    %p255 = scmp.ne.s32.totalorder %s250, %s252
    %p256 = scmp.eq.s32.totalorder %s22, 0
    %p257 = por %p255, %p256
    %p258 = scmp.ne.s32.totalorder %s250, %s252
    %p259 = scmp.eq.s32.totalorder %s27, 1
    %p260 = por %p258, %p259
    %p261 = scmp.ne.s32.totalorder %s252, %s253
    %p262 = scmp.eq.s32.totalorder %s27, 0
    %p263 = por %p261, %p262
    %p264 = scmp.ne.s32.totalorder %s252, %s253
    %p265 = scmp.eq.s32.totalorder %s28, 1
    %p266 = por %p264, %p265
    %p268 = scmp.ne.s32.totalorder %s253, %s267
    %p269 = scmp.eq.s32.totalorder %s28, 0
    %p270 = por %p268, %p269
    %s272 = sadd.s32 %s271, 1
    %p275 = scmp.eq.s32.totalorder %s22, 1
    %p276 = scmp.ne.s32.totalorder %s271, %s273
    %p277 = scmp.eq.s32.totalorder %s22, 0
    %p278 = por %p276, %p277
    %p279 = scmp.ne.s32.totalorder %s271, %s273
    %p280 = scmp.eq.s32.totalorder %s27, 1
    %p281 = por %p279, %p280
    %p282 = scmp.ne.s32.totalorder %s273, %s274
    %p283 = scmp.eq.s32.totalorder %s27, 0
    %p284 = por %p282, %p283
    %p285 = scmp.ne.s32.totalorder %s273, %s274
    %p286 = scmp.eq.s32.totalorder %s28, 1
    %p287 = por %p285, %p286
    %p289 = scmp.ne.s32.totalorder %s274, %s288
    %p290 = scmp.eq.s32.totalorder %s28, 0
    %p291 = por %p289, %p290
    %s293 = sadd.s32 %s292, 1
    %p296 = scmp.eq.s32.totalorder %s22, 1
    %p297 = scmp.ne.s32.totalorder %s292, %s294
    %p298 = scmp.eq.s32.totalorder %s22, 0
    %p299 = por %p297, %p298
    %p300 = scmp.ne.s32.totalorder %s292, %s294
    %p301 = scmp.eq.s32.totalorder %s27, 1
    %p302 = por %p300, %p301
    %p303 = scmp.ne.s32.totalorder %s294, %s295
    %p304 = scmp.eq.s32.totalorder %s27, 0
    %p305 = por %p303, %p304
    %p306 = scmp.ne.s32.totalorder %s294, %s295
    %p307 = scmp.eq.s32.totalorder %s28, 1
    %p308 = por %p306, %p307
    %p310 = scmp.ne.s32.totalorder %s295, %s309
    %p311 = scmp.eq.s32.totalorder %s28, 0
    %p312 = por %p310, %p311
    %s313 = ssub.s32 %s22, %s29
    %p314 = scmp.eq.s32.totalorder %s313, 0
    %s316 = sadd.s32 %s315, 1
    %s317 = scalar_select %p314, %s315, %s316
    %p320 = pneg %p314
    %p321 = scmp.eq.s32.totalorder %s22, 1
    %p322 = por %p320, %p321
    %p323 = scmp.ne.s32.totalorder %s315, %s318
    %p324 = scmp.eq.s32.totalorder %s22, 0
    %p325 = por %p323, %p324
    %p326 = scmp.ne.s32.totalorder %s315, %s318
    %p327 = scmp.eq.s32.totalorder %s27, 1
    %p328 = por %p326, %p327
    %p329 = scmp.ne.s32.totalorder %s318, %s319
    %p330 = scmp.eq.s32.totalorder %s27, 0
    %p331 = por %p329, %p330
    %p332 = scmp.ne.s32.totalorder %s318, %s319
    %p333 = scmp.eq.s32.totalorder %s28, 1
    %p334 = por %p332, %p333
    %p336 = scmp.ne.s32.totalorder %s319, %s335
    %p337 = scmp.eq.s32.totalorder %s28, 0
    %p338 = por %p336, %p337
    %s339 = ssub.s32 %s22, %s29
    %p340 = scmp.eq.s32.totalorder %s339, 0
    %s342 = sadd.s32 %s341, 1
    %s343 = scalar_select %p340, %s341, %s342
    %p346 = pneg %p340
    %p347 = scmp.eq.s32.totalorder %s22, 1
    %p348 = por %p346, %p347
    %p349 = scmp.ne.s32.totalorder %s341, %s344
    %p350 = scmp.eq.s32.totalorder %s22, 0
    %p351 = por %p349, %p350
    %p352 = scmp.ne.s32.totalorder %s341, %s344
    %p353 = scmp.eq.s32.totalorder %s27, 1
    %p354 = por %p352, %p353
    %p355 = scmp.ne.s32.totalorder %s344, %s345
    %p356 = scmp.eq.s32.totalorder %s27, 0
    %p357 = por %p355, %p356
    %p358 = scmp.ne.s32.totalorder %s344, %s345
    %p359 = scmp.eq.s32.totalorder %s28, 1
    %p360 = por %p358, %p359
    %p362 = scmp.ne.s32.totalorder %s345, %s361
    %p363 = scmp.eq.s32.totalorder %s28, 0
    %p364 = por %p362, %p363
    %s365 = ssub.s32 %s22, %s29
    %p366 = scmp.eq.s32.totalorder %s365, 0
    %s368 = sadd.s32 %s367, 1
    %s369 = scalar_select %p366, %s367, %s368
    %p372 = pneg %p366
    %p373 = scmp.eq.s32.totalorder %s22, 1
    %p374 = por %p372, %p373
    %p375 = scmp.ne.s32.totalorder %s367, %s370
    %p376 = scmp.eq.s32.totalorder %s22, 0
    %p377 = por %p375, %p376
    %p378 = scmp.ne.s32.totalorder %s367, %s370
    %p379 = scmp.eq.s32.totalorder %s27, 1
    %p380 = por %p378, %p379
    %p381 = scmp.ne.s32.totalorder %s370, %s371
    %p382 = scmp.eq.s32.totalorder %s27, 0
    %p383 = por %p381, %p382
    %p384 = scmp.ne.s32.totalorder %s370, %s371
    %p385 = scmp.eq.s32.totalorder %s28, 1
    %p386 = por %p384, %p385
    %p388 = scmp.ne.s32.totalorder %s371, %s387
    %p389 = scmp.eq.s32.totalorder %s28, 0
    %p390 = por %p388, %p389
    %p391 = scmp.le.s32.totalorder 1, %s22
    %p392 = scmp.lt.s32.totalorder %s22, 3
    %p393 = pnand %p391, %p392
    %p394 = pneg %p393
    // Predicated region
    $region9: #{tpu_custom_call.1} parent=5 // pred_check
      _
    $region10: #{tpu_custom_call.1} parent=5 // pred_check_branch
      %396 = sbr.rel (%p393) target = $region12
    $region11: #{tpu_custom_call.1} parent=5 // pred_region
      %s397 = ssub.s32 %s22, 1
      // Predicated region
      $region13: #{tpu_custom_call.1} parent=11 // pred_check
        %p398 = pneg %p95
      $region14: #{tpu_custom_call.1} parent=11 // pred_check_branch
        %400 = sbr.rel (%p398) target = $region16
      $region15: #{tpu_custom_call.1} parent=11 // pred_region
        _
      $region16: #{tpu_custom_call.1} parent=11 // pred_fallthru
        _
      // Predicated region
      $region17: #{tpu_custom_call.1} parent=11 // pred_check
        %p401 = pneg %p116
      $region18: #{tpu_custom_call.1} parent=11 // pred_check_branch
        %403 = sbr.rel (%p401) target = $region20
      $region19: #{tpu_custom_call.1} parent=11 // pred_region
        _
      $region20: #{tpu_custom_call.1} parent=11 // pred_fallthru
        _
      // Predicated region
      $region21: #{tpu_custom_call.1} parent=11 // pred_check
        %p404 = pneg %p137
      $region22: #{tpu_custom_call.1} parent=11 // pred_check_branch
        %406 = sbr.rel (%p404) target = $region24
      $region23: #{tpu_custom_call.1} parent=11 // pred_region
        _
      $region24: #{tpu_custom_call.1} parent=11 // pred_fallthru
        _
      // Predicated region
      $region25: #{tpu_custom_call.1} parent=11 // pred_check
        %p407 = pneg %p158
      $region26: #{tpu_custom_call.1} parent=11 // pred_check_branch
        %409 = sbr.rel (%p407) target = $region28
      $region27: #{tpu_custom_call.1} parent=11 // pred_region
        _
      $region28: #{tpu_custom_call.1} parent=11 // pred_fallthru
        _
      // Predicated region
      $region29: #{tpu_custom_call.1} parent=11 // pred_check
        %p410 = pneg %p179
      $region30: #{tpu_custom_call.1} parent=11 // pred_check_branch
        %412 = sbr.rel (%p410) target = $region32
      $region31: #{tpu_custom_call.1} parent=11 // pred_region
        _
      $region32: #{tpu_custom_call.1} parent=11 // pred_fallthru
        _
      // Predicated region
      $region33: #{tpu_custom_call.1} parent=11 // pred_check
        %p413 = pneg %p200
      $region34: #{tpu_custom_call.1} parent=11 // pred_check_branch
        %415 = sbr.rel (%p413) target = $region36
      $region35: #{tpu_custom_call.1} parent=11 // pred_region
        _
      $region36: #{tpu_custom_call.1} parent=11 // pred_fallthru
        _
      // Predicated region
      $region37: #{tpu_custom_call.1} parent=11 // pred_check
        %p416 = pneg %p221
      $region38: #{tpu_custom_call.1} parent=11 // pred_check_branch
        %418 = sbr.rel (%p416) target = $region40
      $region39: #{tpu_custom_call.1} parent=11 // pred_region
        _
      $region40: #{tpu_custom_call.1} parent=11 // pred_fallthru
        _
      // Predicated region
      $region41: #{tpu_custom_call.1} parent=11 // pred_check
        %p419 = pneg %p242
      $region42: #{tpu_custom_call.1} parent=11 // pred_check_branch
        %421 = sbr.rel (%p419) target = $region44
      $region43: #{tpu_custom_call.1} parent=11 // pred_region
        _
      $region44: #{tpu_custom_call.1} parent=11 // pred_fallthru
        _
      // Predicated region
      $region45: #{tpu_custom_call.1} parent=11 // pred_check
        %p422 = pneg %p263
      $region46: #{tpu_custom_call.1} parent=11 // pred_check_branch
        %424 = sbr.rel (%p422) target = $region48
      $region47: #{tpu_custom_call.1} parent=11 // pred_region
        _
      $region48: #{tpu_custom_call.1} parent=11 // pred_fallthru
        _
      // Predicated region
      $region49: #{tpu_custom_call.1} parent=11 // pred_check
        %p425 = pneg %p284
      $region50: #{tpu_custom_call.1} parent=11 // pred_check_branch
        %427 = sbr.rel (%p425) target = $region52
      $region51: #{tpu_custom_call.1} parent=11 // pred_region
        _
      $region52: #{tpu_custom_call.1} parent=11 // pred_fallthru
        _
      // Predicated region
      $region53: #{tpu_custom_call.1} parent=11 // pred_check
        %p428 = pneg %p305
      $region54: #{tpu_custom_call.1} parent=11 // pred_check_branch
        %430 = sbr.rel (%p428) target = $region56
      $region55: #{tpu_custom_call.1} parent=11 // pred_region
        _
      $region56: #{tpu_custom_call.1} parent=11 // pred_fallthru
        _
    $region12: #{tpu_custom_call.1} parent=5 // pred_fallthru
      _
    %p431 = scmp.lt.s32.totalorder %s22, 2
    // Predicated region
    $region57: #{tpu_custom_call.1} parent=5 // pred_check
      %p432 = pneg %p431
    $region58: #{tpu_custom_call.1} parent=5 // pred_check_branch
      %434 = sbr.rel (%p432) target = $region60
    $region59: #{tpu_custom_call.1} parent=5 // pred_region
      // Predicated region
      $region61: #{tpu_custom_call.1} parent=59 // pred_check
        %p435 = pneg %p42
      $region62: #{tpu_custom_call.1} parent=59 // pred_check_branch
        %437 = sbr.rel (%p435) target = $region64
      $region63: #{tpu_custom_call.1} parent=59 // pred_region
        %p438 = scmp.lt.s32.totalorder %s22, 1
        %s439 = scalar_select %p438, %s22, 1
        %s440 = smul.addr %s439, 16
        %s441 = smul.addr %s440, 8
        %s442 = scalar_lea.vmem %s0, %s441
      $region64: #{tpu_custom_call.1} parent=59 // pred_fallthru
        _
      // Predicated region
      $region65: #{tpu_custom_call.1} parent=59 // pred_check
        %p443 = pneg %p68
      $region66: #{tpu_custom_call.1} parent=59 // pred_check_branch
        %445 = sbr.rel (%p443) target = $region68
      $region67: #{tpu_custom_call.1} parent=59 // pred_region
        %p446 = scmp.lt.s32.totalorder %s22, 1
        %s447 = scalar_select %p446, %s22, 1
        %s448 = smul.addr %s447, 18
        %s449 = smul.addr %s448, 8
        %s450 = scalar_lea.vmem %s1, %s449
      $region68: #{tpu_custom_call.1} parent=59 // pred_fallthru
        _
    $region60: #{tpu_custom_call.1} parent=5 // pred_fallthru
      _
    %p451 = scmp.le.s32.totalorder 1, %s22
    %p452 = scmp.lt.s32.totalorder %s22, 3
    %p453 = pnand %p451, %p452
    %p454 = pneg %p453
    // Predicated region
    $region69: #{tpu_custom_call.1} parent=5 // pred_check
      _
    $region70: #{tpu_custom_call.1} parent=5 // pred_check_branch
      %456 = sbr.rel (%p453) target = $region72
    $region71: #{tpu_custom_call.1} parent=5 // pred_region
      %s457 = ssub.s32 %s22, 1
      %p458 = scmp.lt.s32.totalorder %s27, 1
      %s459 = scalar_select %p458, %s27, 1
      %s460 = smul.addr %s459, 16
      %s461 = smul.addr %s460, 8
      %s462 = scalar_lea.vmem %s0, %s461
      %p463 = pneg %p48
      %p464 = pneg %p45
      %p465 = scmp.lt.s32.totalorder %s27, 1
      %s466 = scalar_select %p465, %s27, 1
      %s467 = smul.addr %s466, 18
      %s468 = smul.addr %s467, 8
      %s469 = scalar_lea.vmem %s1, %s468
      %p470 = pneg %p74
      %p471 = pneg %p71
      %p472 = pneg %p95
      %p473 = pneg %p92
      %p474 = pneg %p116
      %p475 = pneg %p113
      %p476 = pneg %p137
      %p477 = pneg %p134
      %p478 = pneg %p158
      %p479 = pneg %p155
      %p480 = pneg %p179
      %p481 = pneg %p176
      %p482 = pneg %p200
      %p483 = pneg %p197
      %p484 = pneg %p221
      %p485 = pneg %p218
      %p486 = pneg %p242
      %p487 = pneg %p239
      %p488 = pneg %p263
      %p489 = pneg %p260
      %p490 = pneg %p284
      %p491 = pneg %p281
      %p492 = pneg %p305
      %p493 = pneg %p302
      %p494 = pneg %p331
      %p495 = pneg %p328
      %p496 = scmp.lt.s32.totalorder %s27, 1
      %s497 = scalar_select %p496, %s27, 1
      %s498 = smul.addr %s497, 18
      %s499 = smul.addr %s498, 4
      %s500 = scalar_lea.vmem %s13, %s499
      %p501 = pneg %p357
      %p502 = pneg %p354
      %p503 = scmp.lt.s32.totalorder %s27, 1
      %s504 = scalar_select %p503, %s27, 1
      %s505 = smul.addr %s504, 16
      %s506 = smul.addr %s505, 4
      %s507 = scalar_lea.vmem %s14, %s506
      %p508 = pneg %p383
      %p509 = pneg %p380
      %p510 = scmp.lt.s32.totalorder %s27, 1
      %s511 = scalar_select %p510, %s27, 1
      %s512 = smul.addr %s511, 18
      %s513 = smul.addr %s512, 4
      %s514 = scalar_lea.vmem %s15, %s513
      %p515 = scmp.lt.s32.totalorder %s27, 1
      %s516 = scalar_select %p515, %s27, 1
      %s517 = smul.addr %s516, 16
      %s518 = smul.addr %s517, 8
      %s519 = scalar_lea.vmem %s0, %s518
      %p520 = scmp.lt.s32.totalorder %s27, 1
      %s521 = scalar_select %p520, %s27, 1
      %s522 = smul.addr %s521, 18
      %s523 = smul.addr %s522, 8
      %s524 = scalar_lea.vmem %s1, %s523
      %p525 = scmp.lt.s32.totalorder %s27, 1
      %s526 = scalar_select %p525, %s27, 1
      %s527 = smul.addr %s526, 18
      %s528 = smul.addr %s527, 4
      %s529 = scalar_lea.vmem %s13, %s528
      %p530 = scmp.lt.s32.totalorder %s27, 1
      %s531 = scalar_select %p530, %s27, 1
      %s532 = smul.addr %s531, 16
      %s533 = smul.addr %s532, 4
      %s534 = scalar_lea.vmem %s14, %s533
      %p535 = scmp.lt.s32.totalorder %s27, 1
      %s536 = scalar_select %p535, %s27, 1
      %s537 = smul.addr %s536, 18
      %s538 = smul.addr %s537, 4
      %s539 = scalar_lea.vmem %s15, %s538
      %v541 = vld [vmem:[%s519] sm:$0xff]
      %v542 = vld [vmem:[%s519 + $0x8] sm:$0xff]
      %v543 = vld [vmem:[%s519 + $0x10] sm:$0xff]
      %v544 = vld [vmem:[%s519 + $0x18] sm:$0xff]
      %v545 = vld [vmem:[%s519 + $0x20] sm:$0xff]
      %v546 = vld [vmem:[%s519 + $0x28] sm:$0xff]
      %v547 = vld [vmem:[%s519 + $0x30] sm:$0xff]
      %v548 = vld [vmem:[%s519 + $0x38] sm:$0xff]
      %v549 = vld [vmem:[%s519 + $0x40] sm:$0xff]
      %v550 = vld [vmem:[%s519 + $0x48] sm:$0xff]
      %v551 = vld [vmem:[%s519 + $0x50] sm:$0xff]
      %v552 = vld [vmem:[%s519 + $0x58] sm:$0xff]
      %v553 = vld [vmem:[%s519 + $0x60] sm:$0xff]
      %v554 = vld [vmem:[%s519 + $0x68] sm:$0xff]
      %v555 = vld [vmem:[%s519 + $0x70] sm:$0xff]
      %v556 = vld [vmem:[%s519 + $0x78] sm:$0xff]
      %v557 = vmul.f32 %v541, 0.9997995
      %v558 = vmul.f32 %v542, 0.9997995
      %v559 = vmul.f32 %v543, 0.9997995
      %v560 = vmul.f32 %v544, 0.9997995
      %v561 = vmul.f32 %v545, 0.9997995
      %v562 = vmul.f32 %v546, 0.9997995
      %v563 = vmul.f32 %v547, 0.9997995
      %v564 = vmul.f32 %v548, 0.9997995
      %v565 = vmul.f32 %v549, 0.9997995
      %v566 = vmul.f32 %v550, 0.9997995
      %v567 = vmul.f32 %v551, 0.9997995
      %v568 = vmul.f32 %v552, 0.9997995
      %v569 = vmul.f32 %v553, 0.9997995
      %v570 = vmul.f32 %v554, 0.9997995
      %v571 = vmul.f32 %v555, 0.9997995
      %v572 = vmul.f32 %v556, 0.9997995
      %v573 = vld [vmem:[%s2] sm:$0xff]
      %v574 = vld [vmem:[%s2 + $0x8] sm:$0xff]
      %v575 = vld [vmem:[%s2 + $0x10] sm:$0xff]
      %v576 = vld [vmem:[%s2 + $0x18] sm:$0xff]
      %v577 = vld [vmem:[%s2 + $0x20] sm:$0xff]
      %v578 = vld [vmem:[%s2 + $0x28] sm:$0xff]
      %v579 = vld [vmem:[%s2 + $0x30] sm:$0xff]
      %v580 = vld [vmem:[%s2 + $0x38] sm:$0xff]
      %v581 = vld [vmem:[%s2 + $0x40] sm:$0xff]
      %v582 = vld [vmem:[%s2 + $0x48] sm:$0xff]
      %v583 = vld [vmem:[%s2 + $0x50] sm:$0xff]
      %v584 = vld [vmem:[%s2 + $0x58] sm:$0xff]
      %v585 = vld [vmem:[%s2 + $0x60] sm:$0xff]
      %v586 = vld [vmem:[%s2 + $0x68] sm:$0xff]
      %v587 = vld [vmem:[%s2 + $0x70] sm:$0xff]
      %v588 = vld [vmem:[%s2 + $0x78] sm:$0xff]
      %v589 = vadd.f32 %v557, %v573
      %v590 = vadd.f32 %v558, %v574
      %v591 = vadd.f32 %v559, %v575
      %v592 = vadd.f32 %v560, %v576
      %v593 = vadd.f32 %v561, %v577
      %v594 = vadd.f32 %v562, %v578
      %v595 = vadd.f32 %v563, %v579
      %v596 = vadd.f32 %v564, %v580
      %v597 = vadd.f32 %v565, %v581
      %v598 = vadd.f32 %v566, %v582
      %v599 = vadd.f32 %v567, %v583
      %v600 = vadd.f32 %v568, %v584
      %v601 = vadd.f32 %v569, %v585
      %v602 = vadd.f32 %v570, %v586
      %v603 = vadd.f32 %v571, %v587
      %v604 = vadd.f32 %v572, %v588
      %v605 = vld [vmem:[%s524] sm:$0xff]
      %v606 = vld [vmem:[%s524 + $0x8] sm:$0xff]
      %v607 = vld [vmem:[%s524 + $0x10] sm:$0xff]
      %v608 = vld [vmem:[%s524 + $0x18] sm:$0xff]
      %v609 = vld [vmem:[%s524 + $0x20] sm:$0xff]
      %v610 = vld [vmem:[%s524 + $0x28] sm:$0xff]
      %v611 = vld [vmem:[%s524 + $0x30] sm:$0xff]
      %v612 = vld [vmem:[%s524 + $0x38] sm:$0xff]
      %v613 = vld [vmem:[%s524 + $0x40] sm:$0xff]
      %v614 = vld [vmem:[%s524 + $0x48] sm:$0xff]
      %v615 = vld [vmem:[%s524 + $0x50] sm:$0xff]
      %v616 = vld [vmem:[%s524 + $0x58] sm:$0xff]
      %v617 = vld [vmem:[%s524 + $0x60] sm:$0xff]
      %v618 = vld [vmem:[%s524 + $0x68] sm:$0xff]
      %v619 = vld [vmem:[%s524 + $0x70] sm:$0xff]
      %v620 = vld [vmem:[%s524 + $0x78] sm:$0xff]
      %v621 = vld [vmem:[%s524 + $0x80] sm:$0xff]
      %v622 = vld [vmem:[%s524 + $0x88] sm:$0xff]
      %v623 = vmul.f32 %v605, 0.9997995
      %v624 = vmul.f32 %v606, 0.9997995
      %v625 = vmul.f32 %v607, 0.9997995
      %v626 = vmul.f32 %v608, 0.9997995
      %v627 = vmul.f32 %v609, 0.9997995
      %v628 = vmul.f32 %v610, 0.9997995
      %v629 = vmul.f32 %v611, 0.9997995
      %v630 = vmul.f32 %v612, 0.9997995
      %v631 = vmul.f32 %v613, 0.9997995
      %v632 = vmul.f32 %v614, 0.9997995
      %v633 = vmul.f32 %v615, 0.9997995
      %v634 = vmul.f32 %v616, 0.9997995
      %v635 = vmul.f32 %v617, 0.9997995
      %v636 = vmul.f32 %v618, 0.9997995
      %v637 = vmul.f32 %v619, 0.9997995
      %v638 = vmul.f32 %v620, 0.9997995
      %v639 = vmul.f32 %v621, 0.9997995
      %v640 = vmul.f32 %v622, 0.9997995
      %v641 = vld [vmem:[%s3] sm:$0xff]
      %v642 = vld [vmem:[%s3 + $0x8] sm:$0xff]
      %v643 = vld [vmem:[%s3 + $0x10] sm:$0xff]
      %v644 = vld [vmem:[%s3 + $0x18] sm:$0xff]
      %v645 = vld [vmem:[%s3 + $0x20] sm:$0xff]
      %v646 = vld [vmem:[%s3 + $0x28] sm:$0xff]
      %v647 = vld [vmem:[%s3 + $0x30] sm:$0xff]
      %v648 = vld [vmem:[%s3 + $0x38] sm:$0xff]
      %v649 = vld [vmem:[%s3 + $0x40] sm:$0xff]
      %v650 = vld [vmem:[%s3 + $0x48] sm:$0xff]
      %v651 = vld [vmem:[%s3 + $0x50] sm:$0xff]
      %v652 = vld [vmem:[%s3 + $0x58] sm:$0xff]
      %v653 = vld [vmem:[%s3 + $0x60] sm:$0xff]
      %v654 = vld [vmem:[%s3 + $0x68] sm:$0xff]
      %v655 = vld [vmem:[%s3 + $0x70] sm:$0xff]
      %v656 = vld [vmem:[%s3 + $0x78] sm:$0xff]
      %v657 = vld [vmem:[%s3 + $0x80] sm:$0xff]
      %v658 = vld [vmem:[%s3 + $0x88] sm:$0xff]
      %v659 = vadd.f32 %v623, %v641
      %v660 = vadd.f32 %v624, %v642
      %v661 = vadd.f32 %v625, %v643
      %v662 = vadd.f32 %v626, %v644
      %v663 = vadd.f32 %v627, %v645
      %v664 = vadd.f32 %v628, %v646
      %v665 = vadd.f32 %v629, %v647
      %v666 = vadd.f32 %v630, %v648
      %v667 = vadd.f32 %v631, %v649
      %v668 = vadd.f32 %v632, %v650
      %v669 = vadd.f32 %v633, %v651
      %v670 = vadd.f32 %v634, %v652
      %v671 = vadd.f32 %v635, %v653
      %v672 = vadd.f32 %v636, %v654
      %v673 = vadd.f32 %v637, %v655
      %v674 = vadd.f32 %v638, %v656
      %v675 = vadd.f32 %v639, %v657
      %v676 = vadd.f32 %v640, %v658
      %v677 = vpack.c.bf16 %v589, %v589
      %v678 = vpack.c.bf16 %v590, %v590
      %v679 = vpack.c.bf16 %v591, %v591
      %v680 = vpack.c.bf16 %v592, %v592
      %v681 = vpack.c.bf16 %v593, %v593
      %v682 = vpack.c.bf16 %v594, %v594
      %v683 = vpack.c.bf16 %v595, %v595
      %v684 = vpack.c.bf16 %v596, %v596
      %v685 = vpack.c.bf16 %v597, %v597
      %v686 = vpack.c.bf16 %v598, %v598
      %v687 = vpack.c.bf16 %v599, %v599
      %v688 = vpack.c.bf16 %v600, %v600
      %v689 = vpack.c.bf16 %v601, %v601
      %v690 = vpack.c.bf16 %v602, %v602
      %v691 = vpack.c.bf16 %v603, %v603
      %v692 = vpack.c.bf16 %v604, %v604
      %vm693 = vcmask 257024
      %694 = vst.msk [vmem:[%s534] sm:$0xf] %vm693, %v677
      %695 = vst.msk [vmem:[%s534 + $0x4] sm:$0xf] %vm693, %v678
      %696 = vst.msk [vmem:[%s534 + $0x8] sm:$0xf] %vm693, %v679
      %697 = vst.msk [vmem:[%s534 + $0xc] sm:$0xf] %vm693, %v680
      %698 = vst.msk [vmem:[%s534 + $0x10] sm:$0xf] %vm693, %v681
      %699 = vst.msk [vmem:[%s534 + $0x14] sm:$0xf] %vm693, %v682
      %700 = vst.msk [vmem:[%s534 + $0x18] sm:$0xf] %vm693, %v683
      %701 = vst.msk [vmem:[%s534 + $0x1c] sm:$0xf] %vm693, %v684
      %702 = vst.msk [vmem:[%s534 + $0x20] sm:$0xf] %vm693, %v685
      %703 = vst.msk [vmem:[%s534 + $0x24] sm:$0xf] %vm693, %v686
      %704 = vst.msk [vmem:[%s534 + $0x28] sm:$0xf] %vm693, %v687
      %705 = vst.msk [vmem:[%s534 + $0x2c] sm:$0xf] %vm693, %v688
      %706 = vst.msk [vmem:[%s534 + $0x30] sm:$0xf] %vm693, %v689
      %707 = vst.msk [vmem:[%s534 + $0x34] sm:$0xf] %vm693, %v690
      %708 = vst.msk [vmem:[%s534 + $0x38] sm:$0xf] %vm693, %v691
      %709 = vst.msk [vmem:[%s534 + $0x3c] sm:$0xf] %vm693, %v692
      %v710 = vpack.c.bf16 %v659, %v659
      %v711 = vpack.c.bf16 %v660, %v660
      %v712 = vpack.c.bf16 %v661, %v661
      %v713 = vpack.c.bf16 %v662, %v662
      %v714 = vpack.c.bf16 %v663, %v663
      %v715 = vpack.c.bf16 %v664, %v664
      %v716 = vpack.c.bf16 %v665, %v665
      %v717 = vpack.c.bf16 %v666, %v666
      %v718 = vpack.c.bf16 %v667, %v667
      %v719 = vpack.c.bf16 %v668, %v668
      %v720 = vpack.c.bf16 %v669, %v669
      %v721 = vpack.c.bf16 %v670, %v670
      %v722 = vpack.c.bf16 %v671, %v671
      %v723 = vpack.c.bf16 %v672, %v672
      %v724 = vpack.c.bf16 %v673, %v673
      %v725 = vpack.c.bf16 %v674, %v674
      %v726 = vpack.c.bf16 %v675, %v675
      %v727 = vpack.c.bf16 %v676, %v676
      %728 = vst.msk [vmem:[%s539] sm:$0xf] %vm693, %v710
      %729 = vst.msk [vmem:[%s539 + $0x4] sm:$0xf] %vm693, %v711
      %730 = vst.msk [vmem:[%s539 + $0x8] sm:$0xf] %vm693, %v712
      %731 = vst.msk [vmem:[%s539 + $0xc] sm:$0xf] %vm693, %v713
      %732 = vst.msk [vmem:[%s539 + $0x10] sm:$0xf] %vm693, %v714
      %733 = vst.msk [vmem:[%s539 + $0x14] sm:$0xf] %vm693, %v715
      %734 = vst.msk [vmem:[%s539 + $0x18] sm:$0xf] %vm693, %v716
      %735 = vst.msk [vmem:[%s539 + $0x1c] sm:$0xf] %vm693, %v717
      %736 = vst.msk [vmem:[%s539 + $0x20] sm:$0xf] %vm693, %v718
      %737 = vst.msk [vmem:[%s539 + $0x24] sm:$0xf] %vm693, %v719
      %738 = vst.msk [vmem:[%s539 + $0x28] sm:$0xf] %vm693, %v720
      %739 = vst.msk [vmem:[%s539 + $0x2c] sm:$0xf] %vm693, %v721
      %740 = vst.msk [vmem:[%s539 + $0x30] sm:$0xf] %vm693, %v722
      %741 = vst.msk [vmem:[%s539 + $0x34] sm:$0xf] %vm693, %v723
      %742 = vst.msk [vmem:[%s539 + $0x38] sm:$0xf] %vm693, %v724
      %743 = vst.msk [vmem:[%s539 + $0x3c] sm:$0xf] %vm693, %v725
      %744 = vst.msk [vmem:[%s539 + $0x40] sm:$0xf] %vm693, %v726
      %745 = vst.msk [vmem:[%s539 + $0x44] sm:$0xf] %vm693, %v727
      %v746 = vld [vmem:[%s4] sm:$0xf]
      %v747 = vld [vmem:[%s4 + $0x4] sm:$0xf]
      %v748 = vld [vmem:[%s4 + $0x8] sm:$0xf]
      %v749 = vld [vmem:[%s4 + $0xc] sm:$0xf]
      %v750 = vld [vmem:[%s5] sm:$0x1]
      %v752 = vperm.slane %v750, 0
      %v772 = vunpack.c.l.b16 %v710
      %v773 = vunpack.c.l.b16 %v711
      %v774 = vunpack.c.l.b16 %v712
      %v775 = vunpack.c.l.b16 %v713
      %v776 = vunpack.c.l.b16 %v714
      %v777 = vunpack.c.l.b16 %v715
      %v778 = vunpack.c.l.b16 %v716
      %v779 = vunpack.c.l.b16 %v717
      %v780 = vunpack.c.l.b16 %v718
      %v781 = vunpack.c.l.b16 %v719
      %v782 = vunpack.c.l.b16 %v720
      %v783 = vunpack.c.l.b16 %v721
      %v784 = vunpack.c.l.b16 %v722
      %v785 = vunpack.c.l.b16 %v723
      %v786 = vunpack.c.l.b16 %v724
      %v787 = vunpack.c.l.b16 %v725
      %v788 = vunpack.c.l.b16 %v726
      %v789 = vunpack.c.l.b16 %v727
      %v790 = vpack.c.b16 %v773, %v772
      %v791 = vpack.c.b16 %v775, %v774
      %v792 = vpack.c.b16 %v777, %v776
      %v793 = vpack.c.b16 %v779, %v778
      %v794 = vpack.c.b16 %v781, %v780
      %v795 = vpack.c.b16 %v783, %v782
      %v796 = vpack.c.b16 %v785, %v784
      %v797 = vpack.c.b16 %v787, %v786
      %v798 = vpack.c.b16 %v789, %v788
      %v803 = vunpack.c.l.b16 %v746
      %v804 = vunpack.c.l.b16 %v747
      %v805 = vunpack.c.l.b16 %v748
      %v806 = vunpack.c.l.b16 %v749
      %v807 = vpack.c.b16 %v804, %v803
      %v808 = vpack.c.b16 %v806, %v805
      %vm811 = vcmask 261120
      %v813 = vsel %vm811, %v790, 0
      %v816 = vsel %vm811, %v791, 0
      %v819 = vsel %vm811, %v792, 0
      %v822 = vsel %vm811, %v793, 0
      %v825 = vsel %vm811, %v794, 0
      %v828 = vsel %vm811, %v795, 0
      %v831 = vsel %vm811, %v796, 0
      %v834 = vsel %vm811, %v797, 0
      %v837 = vsel %vm811, %v798, 0
      %839 = vmatpush.bf16.msra.mxu0 0
      %840 = vmatpush.bf16.msra.mxu0 0
      %841 = vmatpush.bf16.msra.mxu0 0
      %842 = vmatpush.bf16.msra.mxu0 0
      %843 = vmatpush.bf16.msra.mxu0 0
      %844 = vmatpush.bf16.msra.mxu0 0
      %845 = vmatpush.bf16.msra.mxu0 %v808
      %846 = vmatpush.bf16.msra.mxu0 %v807
      %847 = vmatmul.bf16.gmra.mxu0 %v813
      %v848 = vpop.f32.mrf.mxu0
      %v849 = vadd.f32 %v752, %v848
      %v850 = vpop.f32.mrf.mxu0
      %v851 = vadd.f32 %v752, %v850
      %852 = vmatmul.bf16.gmra.mxu0 %v816
      %v853 = vpop.f32.mrf.mxu0
      %v854 = vadd.f32 %v752, %v853
      %v855 = vpop.f32.mrf.mxu0
      %v856 = vadd.f32 %v752, %v855
      %857 = vmatmul.bf16.gmra.mxu0 %v819
      %v858 = vpop.f32.mrf.mxu0
      %v859 = vadd.f32 %v752, %v858
      %v860 = vpop.f32.mrf.mxu0
      %v861 = vadd.f32 %v752, %v860
      %862 = vmatmul.bf16.gmra.mxu0 %v822
      %v863 = vpop.f32.mrf.mxu0
      %v864 = vadd.f32 %v752, %v863
      %v865 = vpop.f32.mrf.mxu0
      %v866 = vadd.f32 %v752, %v865
      %867 = vmatmul.bf16.gmra.mxu0 %v825
      %v868 = vpop.f32.mrf.mxu0
      %v869 = vadd.f32 %v752, %v868
      %v870 = vpop.f32.mrf.mxu0
      %v871 = vadd.f32 %v752, %v870
      %872 = vmatmul.bf16.gmra.mxu0 %v828
      %v873 = vpop.f32.mrf.mxu0
      %v874 = vadd.f32 %v752, %v873
      %v875 = vpop.f32.mrf.mxu0
      %v876 = vadd.f32 %v752, %v875
      %877 = vmatmul.bf16.gmra.mxu0 %v831
      %v878 = vpop.f32.mrf.mxu0
      %v879 = vadd.f32 %v752, %v878
      %v880 = vpop.f32.mrf.mxu0
      %v881 = vadd.f32 %v752, %v880
      %882 = vmatmul.bf16.gmra.mxu0 %v834
      %v883 = vpop.f32.mrf.mxu0
      %v884 = vadd.f32 %v752, %v883
      %v885 = vpop.f32.mrf.mxu0
      %v886 = vadd.f32 %v752, %v885
      %887 = vmatmul.bf16.gmra.mxu0 %v837
      %v888 = vpop.f32.mrf.mxu0
      %v889 = vadd.f32 %v752, %v888
      %v890 = vpop.f32.mrf.mxu0
      %v891 = vadd.f32 %v752, %v890
      %892 = vdwg.mxu0
      %v893 = vpack.c.bf16 %v851, %v849
      %v894 = vpack.c.bf16 %v856, %v854
      %v895 = vpack.c.bf16 %v861, %v859
      %v896 = vpack.c.bf16 %v866, %v864
      %v897 = vpack.c.bf16 %v871, %v869
      %v898 = vpack.c.bf16 %v876, %v874
      %v899 = vpack.c.bf16 %v881, %v879
      %v900 = vpack.c.bf16 %v886, %v884
      %v901 = vpack.c.bf16 %v891, %v889
      %v902 = vld [vmem:[%s6] sm:$0xf]
      %v903 = vld [vmem:[%s6 + $0x4] sm:$0xf]
      %v904 = vld [vmem:[%s6 + $0x8] sm:$0xf]
      %v905 = vld [vmem:[%s6 + $0xc] sm:$0xf]
      %v906 = vld [vmem:[%s7] sm:$0x1]
      %v908 = vperm.slane %v906, 0
      %v926 = vunpack.c.l.b16 %v677
      %v927 = vunpack.c.l.b16 %v678
      %v928 = vunpack.c.l.b16 %v679
      %v929 = vunpack.c.l.b16 %v680
      %v930 = vunpack.c.l.b16 %v681
      %v931 = vunpack.c.l.b16 %v682
      %v932 = vunpack.c.l.b16 %v683
      %v933 = vunpack.c.l.b16 %v684
      %v934 = vunpack.c.l.b16 %v685
      %v935 = vunpack.c.l.b16 %v686
      %v936 = vunpack.c.l.b16 %v687
      %v937 = vunpack.c.l.b16 %v688
      %v938 = vunpack.c.l.b16 %v689
      %v939 = vunpack.c.l.b16 %v690
      %v940 = vunpack.c.l.b16 %v691
      %v941 = vunpack.c.l.b16 %v692
      %v942 = vpack.c.b16 %v927, %v926
      %v943 = vpack.c.b16 %v929, %v928
      %v944 = vpack.c.b16 %v931, %v930
      %v945 = vpack.c.b16 %v933, %v932
      %v946 = vpack.c.b16 %v935, %v934
      %v947 = vpack.c.b16 %v937, %v936
      %v948 = vpack.c.b16 %v939, %v938
      %v949 = vpack.c.b16 %v941, %v940
      %v954 = vunpack.c.l.b16 %v902
      %v955 = vunpack.c.l.b16 %v903
      %v956 = vunpack.c.l.b16 %v904
      %v957 = vunpack.c.l.b16 %v905
      %v958 = vpack.c.b16 %v955, %v954
      %v959 = vpack.c.b16 %v957, %v956
      %v963 = vsel %vm811, %v942, 0
      %v966 = vsel %vm811, %v943, 0
      %v969 = vsel %vm811, %v944, 0
      %v972 = vsel %vm811, %v945, 0
      %v975 = vsel %vm811, %v946, 0
      %v978 = vsel %vm811, %v947, 0
      %v981 = vsel %vm811, %v948, 0
      %v984 = vsel %vm811, %v949, 0
      %986 = vmatpush.bf16.msra.mxu0 0
      %987 = vmatpush.bf16.msra.mxu0 0
      %988 = vmatpush.bf16.msra.mxu0 0
      %989 = vmatpush.bf16.msra.mxu0 0
      %990 = vmatpush.bf16.msra.mxu0 0
      %991 = vmatpush.bf16.msra.mxu0 0
      %992 = vmatpush.bf16.msra.mxu0 %v959
      %993 = vmatpush.bf16.msra.mxu0 %v958
      %994 = vmatmul.bf16.gmra.mxu0 %v963
      %v995 = vpop.f32.mrf.mxu0
      %v996 = vadd.f32 %v908, %v995
      %v997 = vpop.f32.mrf.mxu0
      %v998 = vadd.f32 %v908, %v997
      %999 = vmatmul.bf16.gmra.mxu0 %v966
      %v1000 = vpop.f32.mrf.mxu0
      %v1001 = vadd.f32 %v908, %v1000
      %v1002 = vpop.f32.mrf.mxu0
      %v1003 = vadd.f32 %v908, %v1002
      %1004 = vmatmul.bf16.gmra.mxu0 %v969
      %v1005 = vpop.f32.mrf.mxu0
      %v1006 = vadd.f32 %v908, %v1005
      %v1007 = vpop.f32.mrf.mxu0
      %v1008 = vadd.f32 %v908, %v1007
      %1009 = vmatmul.bf16.gmra.mxu0 %v972
      %v1010 = vpop.f32.mrf.mxu0
      %v1011 = vadd.f32 %v908, %v1010
      %v1012 = vpop.f32.mrf.mxu0
      %v1013 = vadd.f32 %v908, %v1012
      %1014 = vmatmul.bf16.gmra.mxu0 %v975
      %v1015 = vpop.f32.mrf.mxu0
      %v1016 = vadd.f32 %v908, %v1015
      %v1017 = vpop.f32.mrf.mxu0
      %v1018 = vadd.f32 %v908, %v1017
      %1019 = vmatmul.bf16.gmra.mxu0 %v978
      %v1020 = vpop.f32.mrf.mxu0
      %v1021 = vadd.f32 %v908, %v1020
      %v1022 = vpop.f32.mrf.mxu0
      %v1023 = vadd.f32 %v908, %v1022
      %1024 = vmatmul.bf16.gmra.mxu0 %v981
      %v1025 = vpop.f32.mrf.mxu0
      %v1026 = vadd.f32 %v908, %v1025
      %v1027 = vpop.f32.mrf.mxu0
      %v1028 = vadd.f32 %v908, %v1027
      %1029 = vmatmul.bf16.gmra.mxu0 %v984
      %v1030 = vpop.f32.mrf.mxu0
      %v1031 = vadd.f32 %v908, %v1030
      %v1032 = vpop.f32.mrf.mxu0
      %v1033 = vadd.f32 %v908, %v1032
      %1034 = vdwg.mxu0
      %v1035 = vpack.c.bf16 %v998, %v996
      %v1036 = vpack.c.bf16 %v1003, %v1001
      %v1037 = vpack.c.bf16 %v1008, %v1006
      %v1038 = vpack.c.bf16 %v1013, %v1011
      %v1039 = vpack.c.bf16 %v1018, %v1016
      %v1040 = vpack.c.bf16 %v1023, %v1021
      %v1041 = vpack.c.bf16 %v1028, %v1026
      %v1042 = vpack.c.bf16 %v1033, %v1031
      %v1043 = vld [vmem:[%s8] sm:$0xf]
      %v1044 = vld [vmem:[%s8 + $0x4] sm:$0xf]
      %v1045 = vld [vmem:[%s8 + $0x8] sm:$0xf]
      %v1046 = vld [vmem:[%s8 + $0xc] sm:$0xf]
      %v1047 = vld [vmem:[%s9] sm:$0x1]
      %v1049 = vperm.slane %v1047, 0
      %v1055 = vunpack.c.l.b16 %v1043
      %v1056 = vunpack.c.l.b16 %v1044
      %v1057 = vunpack.c.l.b16 %v1045
      %v1058 = vunpack.c.l.b16 %v1046
      %v1059 = vpack.c.b16 %v1056, %v1055
      %v1060 = vpack.c.b16 %v1058, %v1057
      %1063 = vmatpush.bf16.msra.mxu0 0
      %1064 = vmatpush.bf16.msra.mxu0 0
      %1065 = vmatpush.bf16.msra.mxu0 0
      %1066 = vmatpush.bf16.msra.mxu0 0
      %1067 = vmatpush.bf16.msra.mxu0 0
      %1068 = vmatpush.bf16.msra.mxu0 0
      %1069 = vmatpush.bf16.msra.mxu0 %v1060
      %1070 = vmatpush.bf16.msra.mxu0 %v1059
      %1071 = vmatmul.bf16.gmra.mxu0 %v813
      %v1072 = vpop.f32.mrf.mxu0
      %v1073 = vadd.f32 %v1049, %v1072
      %v1074 = vpop.f32.mrf.mxu0
      %v1075 = vadd.f32 %v1049, %v1074
      %1076 = vmatmul.bf16.gmra.mxu0 %v816
      %v1077 = vpop.f32.mrf.mxu0
      %v1078 = vadd.f32 %v1049, %v1077
      %v1079 = vpop.f32.mrf.mxu0
      %v1080 = vadd.f32 %v1049, %v1079
      %1081 = vmatmul.bf16.gmra.mxu0 %v819
      %v1082 = vpop.f32.mrf.mxu0
      %v1083 = vadd.f32 %v1049, %v1082
      %v1084 = vpop.f32.mrf.mxu0
      %v1085 = vadd.f32 %v1049, %v1084
      %1086 = vmatmul.bf16.gmra.mxu0 %v822
      %v1087 = vpop.f32.mrf.mxu0
      %v1088 = vadd.f32 %v1049, %v1087
      %v1089 = vpop.f32.mrf.mxu0
      %v1090 = vadd.f32 %v1049, %v1089
      %1091 = vmatmul.bf16.gmra.mxu0 %v825
      %v1092 = vpop.f32.mrf.mxu0
      %v1093 = vadd.f32 %v1049, %v1092
      %v1094 = vpop.f32.mrf.mxu0
      %v1095 = vadd.f32 %v1049, %v1094
      %1096 = vmatmul.bf16.gmra.mxu0 %v828
      %v1097 = vpop.f32.mrf.mxu0
      %v1098 = vadd.f32 %v1049, %v1097
      %v1099 = vpop.f32.mrf.mxu0
      %v1100 = vadd.f32 %v1049, %v1099
      %1101 = vmatmul.bf16.gmra.mxu0 %v831
      %v1102 = vpop.f32.mrf.mxu0
      %v1103 = vadd.f32 %v1049, %v1102
      %v1104 = vpop.f32.mrf.mxu0
      %v1105 = vadd.f32 %v1049, %v1104
      %1106 = vmatmul.bf16.gmra.mxu0 %v834
      %v1107 = vpop.f32.mrf.mxu0
      %v1108 = vadd.f32 %v1049, %v1107
      %v1109 = vpop.f32.mrf.mxu0
      %v1110 = vadd.f32 %v1049, %v1109
      %1111 = vmatmul.bf16.gmra.mxu0 %v837
      %v1112 = vpop.f32.mrf.mxu0
      %v1113 = vadd.f32 %v1049, %v1112
      %v1114 = vpop.f32.mrf.mxu0
      %v1115 = vadd.f32 %v1049, %v1114
      %1116 = vdwg.mxu0
      %v1117 = vmax.f32 %v1073, 0.0
      %v1118 = vmax.f32 %v1075, 0.0
      %v1119 = vmax.f32 %v1078, 0.0
      %v1120 = vmax.f32 %v1080, 0.0
      %v1121 = vmax.f32 %v1083, 0.0
      %v1122 = vmax.f32 %v1085, 0.0
      %v1123 = vmax.f32 %v1088, 0.0
      %v1124 = vmax.f32 %v1090, 0.0
      %v1125 = vmax.f32 %v1093, 0.0
      %v1126 = vmax.f32 %v1095, 0.0
      %v1127 = vmax.f32 %v1098, 0.0
      %v1128 = vmax.f32 %v1100, 0.0
      %v1129 = vmax.f32 %v1103, 0.0
      %v1130 = vmax.f32 %v1105, 0.0
      %v1131 = vmax.f32 %v1108, 0.0
      %v1132 = vmax.f32 %v1110, 0.0
      %v1133 = vmax.f32 %v1113, 0.0
      %v1134 = vmax.f32 %v1115, 0.0
      %v1135 = vpack.c.bf16 %v1118, %v1117
      %v1136 = vpack.c.bf16 %v1120, %v1119
      %v1137 = vpack.c.bf16 %v1122, %v1121
      %v1138 = vpack.c.bf16 %v1124, %v1123
      %v1139 = vpack.c.bf16 %v1126, %v1125
      %v1140 = vpack.c.bf16 %v1128, %v1127
      %v1141 = vpack.c.bf16 %v1130, %v1129
      %v1142 = vpack.c.bf16 %v1132, %v1131
      %v1143 = vpack.c.bf16 %v1134, %v1133
      %1144 = vmatpush.bf16.msra.mxu0 0
      %1145 = vmatpush.bf16.msra.mxu0 0
      %1146 = vmatpush.bf16.msra.mxu0 0
      %1147 = vmatpush.bf16.msra.mxu0 0
      %1148 = vmatpush.bf16.msra.mxu0 0
      %1149 = vmatpush.bf16.msra.mxu0 0
      %1150 = vmatpush.bf16.msra.mxu0 %v1060
      %1151 = vmatpush.bf16.msra.mxu0 %v1059
      %1152 = vmatmul.bf16.gmra.mxu0 %v963
      %v1153 = vpop.f32.mrf.mxu0
      %v1154 = vadd.f32 %v1049, %v1153
      %v1155 = vpop.f32.mrf.mxu0
      %v1156 = vadd.f32 %v1049, %v1155
      %1157 = vmatmul.bf16.gmra.mxu0 %v966
      %v1158 = vpop.f32.mrf.mxu0
      %v1159 = vadd.f32 %v1049, %v1158
      %v1160 = vpop.f32.mrf.mxu0
      %v1161 = vadd.f32 %v1049, %v1160
      %1162 = vmatmul.bf16.gmra.mxu0 %v969
      %v1163 = vpop.f32.mrf.mxu0
      %v1164 = vadd.f32 %v1049, %v1163
      %v1165 = vpop.f32.mrf.mxu0
      %v1166 = vadd.f32 %v1049, %v1165
      %1167 = vmatmul.bf16.gmra.mxu0 %v972
      %v1168 = vpop.f32.mrf.mxu0
      %v1169 = vadd.f32 %v1049, %v1168
      %v1170 = vpop.f32.mrf.mxu0
      %v1171 = vadd.f32 %v1049, %v1170
      %1172 = vmatmul.bf16.gmra.mxu0 %v975
      %v1173 = vpop.f32.mrf.mxu0
      %v1174 = vadd.f32 %v1049, %v1173
      %v1175 = vpop.f32.mrf.mxu0
      %v1176 = vadd.f32 %v1049, %v1175
      %1177 = vmatmul.bf16.gmra.mxu0 %v978
      %v1178 = vpop.f32.mrf.mxu0
      %v1179 = vadd.f32 %v1049, %v1178
      %v1180 = vpop.f32.mrf.mxu0
      %v1181 = vadd.f32 %v1049, %v1180
      %1182 = vmatmul.bf16.gmra.mxu0 %v981
      %v1183 = vpop.f32.mrf.mxu0
      %v1184 = vadd.f32 %v1049, %v1183
      %v1185 = vpop.f32.mrf.mxu0
      %v1186 = vadd.f32 %v1049, %v1185
      %1187 = vmatmul.bf16.gmra.mxu0 %v984
      %v1188 = vpop.f32.mrf.mxu0
      %v1189 = vadd.f32 %v1049, %v1188
      %v1190 = vpop.f32.mrf.mxu0
      %v1191 = vadd.f32 %v1049, %v1190
      %1192 = vdwg.mxu0
      %v1193 = vmax.f32 %v1154, 0.0
      %v1194 = vmax.f32 %v1156, 0.0
      %v1195 = vmax.f32 %v1159, 0.0
      %v1196 = vmax.f32 %v1161, 0.0
      %v1197 = vmax.f32 %v1164, 0.0
      %v1198 = vmax.f32 %v1166, 0.0
      %v1199 = vmax.f32 %v1169, 0.0
      %v1200 = vmax.f32 %v1171, 0.0
      %v1201 = vmax.f32 %v1174, 0.0
      %v1202 = vmax.f32 %v1176, 0.0
      %v1203 = vmax.f32 %v1179, 0.0
      %v1204 = vmax.f32 %v1181, 0.0
      %v1205 = vmax.f32 %v1184, 0.0
      %v1206 = vmax.f32 %v1186, 0.0
      %v1207 = vmax.f32 %v1189, 0.0
      %v1208 = vmax.f32 %v1191, 0.0
      %v1209 = vpack.c.bf16 %v1194, %v1193
      %v1210 = vpack.c.bf16 %v1196, %v1195
      %v1211 = vpack.c.bf16 %v1198, %v1197
      %v1212 = vpack.c.bf16 %v1200, %v1199
      %v1213 = vpack.c.bf16 %v1202, %v1201
      %v1214 = vpack.c.bf16 %v1204, %v1203
      %v1215 = vpack.c.bf16 %v1206, %v1205
      %v1216 = vpack.c.bf16 %v1208, %v1207
      %v1218 = vsel %vm811, %v893, 0
      %v1221 = vsel %vm811, %v894, 0
      %v1224 = vsel %vm811, %v895, 0
      %v1227 = vsel %vm811, %v896, 0
      %v1230 = vsel %vm811, %v897, 0
      %v1233 = vsel %vm811, %v898, 0
      %v1236 = vsel %vm811, %v899, 0
      %v1239 = vsel %vm811, %v900, 0
      %v1242 = vsel %vm811, %v901, 0
      %v1245 = vsel %vm811, %v1035, 0
      %v1248 = vsel %vm811, %v1036, 0
      %v1251 = vsel %vm811, %v1037, 0
      %v1254 = vsel %vm811, %v1038, 0
      %v1257 = vsel %vm811, %v1039, 0
      %v1260 = vsel %vm811, %v1040, 0
      %v1263 = vsel %vm811, %v1041, 0
      %v1266 = vsel %vm811, %v1042, 0
      %1268 = vmatpush.bf16.xpose.msra.mxu0 %v1266
      %1269 = vmatpush.bf16.xpose.msra.mxu0 %v1263
      %1270 = vmatpush.bf16.xpose.msra.mxu0 %v1260
      %1271 = vmatpush.bf16.xpose.msra.mxu0 %v1257
      %1272 = vmatpush.bf16.xpose.msra.mxu0 %v1254
      %1273 = vmatpush.bf16.xpose.msra.mxu0 %v1251
      %1274 = vmatpush.bf16.xpose.msra.mxu0 %v1248
      %1275 = vmatpush.bf16.xpose.msra.mxu0 %v1245
      %1276 = vmatmul.bf16.gmra.mxu0 %v1218
      %v1277 = vpop.f32.mrf.mxu0
      %v1278 = vadd.f32 0.0, %v1277
      %v1279 = vpop.f32.mrf.mxu0
      %v1280 = vadd.f32 0.0, %v1279
      %1281 = vmatmul.bf16.gmra.mxu0 %v1221
      %v1282 = vpop.f32.mrf.mxu0
      %v1283 = vadd.f32 0.0, %v1282
      %v1284 = vpop.f32.mrf.mxu0
      %v1285 = vadd.f32 0.0, %v1284
      %1286 = vmatmul.bf16.gmra.mxu0 %v1224
      %v1287 = vpop.f32.mrf.mxu0
      %v1288 = vadd.f32 0.0, %v1287
      %v1289 = vpop.f32.mrf.mxu0
      %v1290 = vadd.f32 0.0, %v1289
      %1291 = vmatmul.bf16.gmra.mxu0 %v1227
      %v1292 = vpop.f32.mrf.mxu0
      %v1293 = vadd.f32 0.0, %v1292
      %v1294 = vpop.f32.mrf.mxu0
      %v1295 = vadd.f32 0.0, %v1294
      %1296 = vmatmul.bf16.gmra.mxu0 %v1230
      %v1297 = vpop.f32.mrf.mxu0
      %v1298 = vadd.f32 0.0, %v1297
      %v1299 = vpop.f32.mrf.mxu0
      %v1300 = vadd.f32 0.0, %v1299
      %1301 = vmatmul.bf16.gmra.mxu0 %v1233
      %v1302 = vpop.f32.mrf.mxu0
      %v1303 = vadd.f32 0.0, %v1302
      %v1304 = vpop.f32.mrf.mxu0
      %v1305 = vadd.f32 0.0, %v1304
      %1306 = vmatmul.bf16.gmra.mxu0 %v1236
      %v1307 = vpop.f32.mrf.mxu0
      %v1308 = vadd.f32 0.0, %v1307
      %v1309 = vpop.f32.mrf.mxu0
      %v1310 = vadd.f32 0.0, %v1309
      %1311 = vmatmul.bf16.gmra.mxu0 %v1239
      %v1312 = vpop.f32.mrf.mxu0
      %v1313 = vadd.f32 0.0, %v1312
      %v1314 = vpop.f32.mrf.mxu0
      %v1315 = vadd.f32 0.0, %v1314
      %1316 = vmatmul.bf16.gmra.mxu0 %v1242
      %v1317 = vpop.f32.mrf.mxu0
      %v1318 = vadd.f32 0.0, %v1317
      %v1319 = vpop.f32.mrf.mxu0
      %v1320 = vadd.f32 0.0, %v1319
      %1321 = vdwg.mxu0
      %v1322 = vlaneseq
      %v1323 = vand.u32 %v1322, 127
      %vm1324 = vcmp.lt.s32.totalorder %v1323, 64
      %v1325 = vsel %vm1324, %v1278, -inf
      %v1326 = vsel %vm1324, %v1280, -inf
      %v1327 = vsel %vm1324, %v1283, -inf
      %v1328 = vsel %vm1324, %v1285, -inf
      %v1329 = vsel %vm1324, %v1288, -inf
      %v1330 = vsel %vm1324, %v1290, -inf
      %v1331 = vsel %vm1324, %v1293, -inf
      %v1332 = vsel %vm1324, %v1295, -inf
      %v1333 = vsel %vm1324, %v1298, -inf
      %v1334 = vsel %vm1324, %v1300, -inf
      %v1335 = vsel %vm1324, %v1303, -inf
      %v1336 = vsel %vm1324, %v1305, -inf
      %v1337 = vsel %vm1324, %v1308, -inf
      %v1338 = vsel %vm1324, %v1310, -inf
      %v1339 = vsel %vm1324, %v1313, -inf
      %v1340 = vsel %vm1324, %v1315, -inf
      %v1341 = vsel %vm1324, %v1318, -inf
      %v1342 = vsel %vm1324, %v1320, -inf
      %1343 = vmax.xlane.f32.xlu0 %v1325
      %v1344 = vpop.xlane.xlu0 %1343
      %1345 = vmax.xlane.f32.xlu0 %v1326
      %v1346 = vpop.xlane.xlu0 %1345
      %1347 = vmax.xlane.f32.xlu0 %v1327
      %v1348 = vpop.xlane.xlu0 %1347
      %1349 = vmax.xlane.f32.xlu0 %v1328
      %v1350 = vpop.xlane.xlu0 %1349
      %1351 = vmax.xlane.f32.xlu0 %v1329
      %v1352 = vpop.xlane.xlu0 %1351
      %1353 = vmax.xlane.f32.xlu0 %v1330
      %v1354 = vpop.xlane.xlu0 %1353
      %1355 = vmax.xlane.f32.xlu0 %v1331
      %v1356 = vpop.xlane.xlu0 %1355
      %1357 = vmax.xlane.f32.xlu0 %v1332
      %v1358 = vpop.xlane.xlu0 %1357
      %1359 = vmax.xlane.f32.xlu0 %v1333
      %v1360 = vpop.xlane.xlu0 %1359
      %1361 = vmax.xlane.f32.xlu0 %v1334
      %v1362 = vpop.xlane.xlu0 %1361
      %1363 = vmax.xlane.f32.xlu0 %v1335
      %v1364 = vpop.xlane.xlu0 %1363
      %1365 = vmax.xlane.f32.xlu0 %v1336
      %v1366 = vpop.xlane.xlu0 %1365
      %1367 = vmax.xlane.f32.xlu0 %v1337
      %v1368 = vpop.xlane.xlu0 %1367
      %1369 = vmax.xlane.f32.xlu0 %v1338
      %v1370 = vpop.xlane.xlu0 %1369
      %1371 = vmax.xlane.f32.xlu0 %v1339
      %v1372 = vpop.xlane.xlu0 %1371
      %1373 = vmax.xlane.f32.xlu0 %v1340
      %v1374 = vpop.xlane.xlu0 %1373
      %1375 = vmax.xlane.f32.xlu0 %v1341
      %v1376 = vpop.xlane.xlu0 %1375
      %1377 = vmax.xlane.f32.xlu0 %v1342
      %v1378 = vpop.xlane.xlu0 %1377
      %v1379 = vsub.f32 %v1325, %v1344
      %v1380 = vsub.f32 %v1326, %v1346
      %v1381 = vsub.f32 %v1327, %v1348
      %v1382 = vsub.f32 %v1328, %v1350
      %v1383 = vsub.f32 %v1329, %v1352
      %v1384 = vsub.f32 %v1330, %v1354
      %v1385 = vsub.f32 %v1331, %v1356
      %v1386 = vsub.f32 %v1332, %v1358
      %v1387 = vsub.f32 %v1333, %v1360
      %v1388 = vsub.f32 %v1334, %v1362
      %v1389 = vsub.f32 %v1335, %v1364
      %v1390 = vsub.f32 %v1336, %v1366
      %v1391 = vsub.f32 %v1337, %v1368
      %v1392 = vsub.f32 %v1338, %v1370
      %v1393 = vsub.f32 %v1339, %v1372
      %v1394 = vsub.f32 %v1340, %v1374
      %v1395 = vsub.f32 %v1341, %v1376
      %v1396 = vsub.f32 %v1342, %v1378
      %v1397 = vmul.f32 %v1379, 1.442695
      %v1398 = vpow.pop %v1397
      %v1399 = vmul.f32 %v1380, 1.442695
      %v1400 = vpow.pop %v1399
      %v1401 = vmul.f32 %v1381, 1.442695
      %v1402 = vpow.pop %v1401
      %v1403 = vmul.f32 %v1382, 1.442695
      %v1404 = vpow.pop %v1403
      %v1405 = vmul.f32 %v1383, 1.442695
      %v1406 = vpow.pop %v1405
      %v1407 = vmul.f32 %v1384, 1.442695
      %v1408 = vpow.pop %v1407
      %v1409 = vmul.f32 %v1385, 1.442695
      %v1410 = vpow.pop %v1409
      %v1411 = vmul.f32 %v1386, 1.442695
      %v1412 = vpow.pop %v1411
      %v1413 = vmul.f32 %v1387, 1.442695
      %v1414 = vpow.pop %v1413
      %v1415 = vmul.f32 %v1388, 1.442695
      %v1416 = vpow.pop %v1415
      %v1417 = vmul.f32 %v1389, 1.442695
      %v1418 = vpow.pop %v1417
      %v1419 = vmul.f32 %v1390, 1.442695
      %v1420 = vpow.pop %v1419
      %v1421 = vmul.f32 %v1391, 1.442695
      %v1422 = vpow.pop %v1421
      %v1423 = vmul.f32 %v1392, 1.442695
      %v1424 = vpow.pop %v1423
      %v1425 = vmul.f32 %v1393, 1.442695
      %v1426 = vpow.pop %v1425
      %v1427 = vmul.f32 %v1394, 1.442695
      %v1428 = vpow.pop %v1427
      %v1429 = vmul.f32 %v1395, 1.442695
      %v1430 = vpow.pop %v1429
      %v1431 = vmul.f32 %v1396, 1.442695
      %v1432 = vpow.pop %v1431
      %1433 = vadd.xlane.f32.xlu0 %v1398
      %v1434 = vpop.xlane.xlu0 %1433
      %1435 = vadd.xlane.f32.xlu0 %v1400
      %v1436 = vpop.xlane.xlu0 %1435
      %1437 = vadd.xlane.f32.xlu0 %v1402
      %v1438 = vpop.xlane.xlu0 %1437
      %1439 = vadd.xlane.f32.xlu0 %v1404
      %v1440 = vpop.xlane.xlu0 %1439
      %1441 = vadd.xlane.f32.xlu0 %v1406
      %v1442 = vpop.xlane.xlu0 %1441
      %1443 = vadd.xlane.f32.xlu0 %v1408
      %v1444 = vpop.xlane.xlu0 %1443
      %1445 = vadd.xlane.f32.xlu0 %v1410
      %v1446 = vpop.xlane.xlu0 %1445
      %1447 = vadd.xlane.f32.xlu0 %v1412
      %v1448 = vpop.xlane.xlu0 %1447
      %1449 = vadd.xlane.f32.xlu0 %v1414
      %v1450 = vpop.xlane.xlu0 %1449
      %1451 = vadd.xlane.f32.xlu0 %v1416
      %v1452 = vpop.xlane.xlu0 %1451
      %1453 = vadd.xlane.f32.xlu0 %v1418
      %v1454 = vpop.xlane.xlu0 %1453
      %1455 = vadd.xlane.f32.xlu0 %v1420
      %v1456 = vpop.xlane.xlu0 %1455
      %1457 = vadd.xlane.f32.xlu0 %v1422
      %v1458 = vpop.xlane.xlu0 %1457
      %1459 = vadd.xlane.f32.xlu0 %v1424
      %v1460 = vpop.xlane.xlu0 %1459
      %1461 = vadd.xlane.f32.xlu0 %v1426
      %v1462 = vpop.xlane.xlu0 %1461
      %1463 = vadd.xlane.f32.xlu0 %v1428
      %v1464 = vpop.xlane.xlu0 %1463
      %1465 = vadd.xlane.f32.xlu0 %v1430
      %v1466 = vpop.xlane.xlu0 %1465
      %1467 = vadd.xlane.f32.xlu0 %v1432
      %v1468 = vpop.xlane.xlu0 %1467
      %v1469 = vpack.c.bf16 %v1400, %v1398
      %v1470 = vpack.c.bf16 %v1404, %v1402
      %v1471 = vpack.c.bf16 %v1408, %v1406
      %v1472 = vpack.c.bf16 %v1412, %v1410
      %v1473 = vpack.c.bf16 %v1416, %v1414
      %v1474 = vpack.c.bf16 %v1420, %v1418
      %v1475 = vpack.c.bf16 %v1424, %v1422
      %v1476 = vpack.c.bf16 %v1428, %v1426
      %v1477 = vpack.c.bf16 %v1432, %v1430
      %1478 = vmatpush.bf16.msra.mxu0 %v1216
      %1479 = vmatpush.bf16.msra.mxu0 %v1215
      %1480 = vmatpush.bf16.msra.mxu0 %v1214
      %1481 = vmatpush.bf16.msra.mxu0 %v1213
      %1482 = vmatpush.bf16.msra.mxu0 %v1212
      %1483 = vmatpush.bf16.msra.mxu0 %v1211
      %1484 = vmatpush.bf16.msra.mxu0 %v1210
      %1485 = vmatpush.bf16.msra.mxu0 %v1209
      %1486 = vmatmul.bf16.gmra.mxu0 %v1469
      %v1487 = vpop.f32.mrf.mxu0
      %v1488 = vadd.f32 0.0, %v1487
      %v1489 = vpop.f32.mrf.mxu0
      %v1490 = vadd.f32 0.0, %v1489
      %1491 = vmatmul.bf16.gmra.mxu0 %v1470
      %v1492 = vpop.f32.mrf.mxu0
      %v1493 = vadd.f32 0.0, %v1492
      %v1494 = vpop.f32.mrf.mxu0
      %v1495 = vadd.f32 0.0, %v1494
      %1496 = vmatmul.bf16.gmra.mxu0 %v1471
      %v1497 = vpop.f32.mrf.mxu0
      %v1498 = vadd.f32 0.0, %v1497
      %v1499 = vpop.f32.mrf.mxu0
      %v1500 = vadd.f32 0.0, %v1499
      %1501 = vmatmul.bf16.gmra.mxu0 %v1472
      %v1502 = vpop.f32.mrf.mxu0
      %v1503 = vadd.f32 0.0, %v1502
      %v1504 = vpop.f32.mrf.mxu0
      %v1505 = vadd.f32 0.0, %v1504
      %1506 = vmatmul.bf16.gmra.mxu0 %v1473
      %v1507 = vpop.f32.mrf.mxu0
      %v1508 = vadd.f32 0.0, %v1507
      %v1509 = vpop.f32.mrf.mxu0
      %v1510 = vadd.f32 0.0, %v1509
      %1511 = vmatmul.bf16.gmra.mxu0 %v1474
      %v1512 = vpop.f32.mrf.mxu0
      %v1513 = vadd.f32 0.0, %v1512
      %v1514 = vpop.f32.mrf.mxu0
      %v1515 = vadd.f32 0.0, %v1514
      %1516 = vmatmul.bf16.gmra.mxu0 %v1475
      %v1517 = vpop.f32.mrf.mxu0
      %v1518 = vadd.f32 0.0, %v1517
      %v1519 = vpop.f32.mrf.mxu0
      %v1520 = vadd.f32 0.0, %v1519
      %1521 = vmatmul.bf16.gmra.mxu0 %v1476
      %v1522 = vpop.f32.mrf.mxu0
      %v1523 = vadd.f32 0.0, %v1522
      %v1524 = vpop.f32.mrf.mxu0
      %v1525 = vadd.f32 0.0, %v1524
      %1526 = vmatmul.bf16.gmra.mxu0 %v1477
      %v1527 = vpop.f32.mrf.mxu0
      %v1528 = vadd.f32 0.0, %v1527
      %v1529 = vpop.f32.mrf.mxu0
      %v1530 = vadd.f32 0.0, %v1529
      %1531 = vdwg.mxu0
      %v1532 = vrcp.pop %v1434
      %v1533 = vrcp.pop %v1436
      %v1534 = vrcp.pop %v1438
      %v1535 = vrcp.pop %v1440
      %v1536 = vrcp.pop %v1442
      %v1537 = vrcp.pop %v1444
      %v1538 = vrcp.pop %v1446
      %v1539 = vrcp.pop %v1448
      %v1540 = vrcp.pop %v1450
      %v1541 = vrcp.pop %v1452
      %v1542 = vrcp.pop %v1454
      %v1543 = vrcp.pop %v1456
      %v1544 = vrcp.pop %v1458
      %v1545 = vrcp.pop %v1460
      %v1546 = vrcp.pop %v1462
      %v1547 = vrcp.pop %v1464
      %v1548 = vrcp.pop %v1466
      %v1549 = vrcp.pop %v1468
      %v1550 = vmul.f32 %v1488, %v1532
      %v1551 = vmul.f32 %v1490, %v1533
      %v1552 = vmul.f32 %v1493, %v1534
      %v1553 = vmul.f32 %v1495, %v1535
      %v1554 = vmul.f32 %v1498, %v1536
      %v1555 = vmul.f32 %v1500, %v1537
      %v1556 = vmul.f32 %v1503, %v1538
      %v1557 = vmul.f32 %v1505, %v1539
      %v1558 = vmul.f32 %v1508, %v1540
      %v1559 = vmul.f32 %v1510, %v1541
      %v1560 = vmul.f32 %v1513, %v1542
      %v1561 = vmul.f32 %v1515, %v1543
      %v1562 = vmul.f32 %v1518, %v1544
      %v1563 = vmul.f32 %v1520, %v1545
      %v1564 = vmul.f32 %v1523, %v1546
      %v1565 = vmul.f32 %v1525, %v1547
      %v1566 = vmul.f32 %v1528, %v1548
      %v1567 = vmul.f32 %v1530, %v1549
      %v1568 = vpack.c.bf16 %v1551, %v1550
      %v1569 = vpack.c.bf16 %v1553, %v1552
      %v1570 = vpack.c.bf16 %v1555, %v1554
      %v1571 = vpack.c.bf16 %v1557, %v1556
      %v1572 = vpack.c.bf16 %v1559, %v1558
      %v1573 = vpack.c.bf16 %v1561, %v1560
      %v1574 = vpack.c.bf16 %v1563, %v1562
      %v1575 = vpack.c.bf16 %v1565, %v1564
      %v1576 = vpack.c.bf16 %v1567, %v1566
      %v1577 = vld [vmem:[%s10] sm:$0xf]
      %v1578 = vld [vmem:[%s10 + $0x4] sm:$0xf]
      %v1579 = vld [vmem:[%s10 + $0x8] sm:$0xf]
      %v1580 = vld [vmem:[%s10 + $0xc] sm:$0xf]
      %v1581 = vld [vmem:[%s11] sm:$0xf]
      %v1582 = vld [vmem:[%s11 + $0x4] sm:$0xf]
      %v1583 = vld [vmem:[%s11 + $0x8] sm:$0xf]
      %v1584 = vld [vmem:[%s11 + $0xc] sm:$0xf]
      %v1589 = vunpack.c.l.b16 %v1581
      %v1590 = vunpack.c.l.b16 %v1582
      %v1591 = vunpack.c.l.b16 %v1583
      %v1592 = vunpack.c.l.b16 %v1584
      %v1593 = vpack.c.b16 %v1590, %v1589
      %v1594 = vpack.c.b16 %v1592, %v1591
      %v1598 = vsel %vm811, %v1135, 0
      %v1601 = vsel %vm811, %v1136, 0
      %v1604 = vsel %vm811, %v1137, 0
      %v1607 = vsel %vm811, %v1138, 0
      %v1610 = vsel %vm811, %v1139, 0
      %v1613 = vsel %vm811, %v1140, 0
      %v1616 = vsel %vm811, %v1141, 0
      %v1619 = vsel %vm811, %v1142, 0
      %v1622 = vsel %vm811, %v1143, 0
      %1624 = vmatpush.bf16.msra.mxu0 0
      %1625 = vmatpush.bf16.msra.mxu0 0
      %1626 = vmatpush.bf16.msra.mxu0 0
      %1627 = vmatpush.bf16.msra.mxu0 0
      %1628 = vmatpush.bf16.msra.mxu0 0
      %1629 = vmatpush.bf16.msra.mxu0 0
      %1630 = vmatpush.bf16.msra.mxu0 %v1594
      %1631 = vmatpush.bf16.msra.mxu0 %v1593
      %1632 = vmatmul.bf16.gmra.mxu0 %v1598
      %v1633 = vpop.f32.mrf.mxu0
      %v1634 = vadd.f32 0.0, %v1633
      %v1635 = vpop.f32.mrf.mxu0
      %v1636 = vadd.f32 0.0, %v1635
      %1637 = vmatmul.bf16.gmra.mxu0 %v1601
      %v1638 = vpop.f32.mrf.mxu0
      %v1639 = vadd.f32 0.0, %v1638
      %v1640 = vpop.f32.mrf.mxu0
      %v1641 = vadd.f32 0.0, %v1640
      %1642 = vmatmul.bf16.gmra.mxu0 %v1604
      %v1643 = vpop.f32.mrf.mxu0
      %v1644 = vadd.f32 0.0, %v1643
      %v1645 = vpop.f32.mrf.mxu0
      %v1646 = vadd.f32 0.0, %v1645
      %1647 = vmatmul.bf16.gmra.mxu0 %v1607
      %v1648 = vpop.f32.mrf.mxu0
      %v1649 = vadd.f32 0.0, %v1648
      %v1650 = vpop.f32.mrf.mxu0
      %v1651 = vadd.f32 0.0, %v1650
      %1652 = vmatmul.bf16.gmra.mxu0 %v1610
      %v1653 = vpop.f32.mrf.mxu0
      %v1654 = vadd.f32 0.0, %v1653
      %v1655 = vpop.f32.mrf.mxu0
      %v1656 = vadd.f32 0.0, %v1655
      %1657 = vmatmul.bf16.gmra.mxu0 %v1613
      %v1658 = vpop.f32.mrf.mxu0
      %v1659 = vadd.f32 0.0, %v1658
      %v1660 = vpop.f32.mrf.mxu0
      %v1661 = vadd.f32 0.0, %v1660
      %1662 = vmatmul.bf16.gmra.mxu0 %v1616
      %v1663 = vpop.f32.mrf.mxu0
      %v1664 = vadd.f32 0.0, %v1663
      %v1665 = vpop.f32.mrf.mxu0
      %v1666 = vadd.f32 0.0, %v1665
      %1667 = vmatmul.bf16.gmra.mxu0 %v1619
      %v1668 = vpop.f32.mrf.mxu0
      %v1669 = vadd.f32 0.0, %v1668
      %v1670 = vpop.f32.mrf.mxu0
      %v1671 = vadd.f32 0.0, %v1670
      %1672 = vmatmul.bf16.gmra.mxu0 %v1622
      %v1673 = vpop.f32.mrf.mxu0
      %v1674 = vadd.f32 0.0, %v1673
      %v1675 = vpop.f32.mrf.mxu0
      %v1676 = vadd.f32 0.0, %v1675
      %1677 = vdwg.mxu0
      %v1682 = vunpack.c.l.b16 %v1577
      %v1683 = vunpack.c.l.b16 %v1578
      %v1684 = vunpack.c.l.b16 %v1579
      %v1685 = vunpack.c.l.b16 %v1580
      %v1686 = vpack.c.b16 %v1683, %v1682
      %v1687 = vpack.c.b16 %v1685, %v1684
      %v1691 = vsel %vm811, %v1568, 0
      %v1694 = vsel %vm811, %v1569, 0
      %v1697 = vsel %vm811, %v1570, 0
      %v1700 = vsel %vm811, %v1571, 0
      %v1703 = vsel %vm811, %v1572, 0
      %v1706 = vsel %vm811, %v1573, 0
      %v1709 = vsel %vm811, %v1574, 0
      %v1712 = vsel %vm811, %v1575, 0
      %v1715 = vsel %vm811, %v1576, 0
      %1717 = vmatpush.bf16.msra.mxu0 0
      %1718 = vmatpush.bf16.msra.mxu0 0
      %1719 = vmatpush.bf16.msra.mxu0 0
      %1720 = vmatpush.bf16.msra.mxu0 0
      %1721 = vmatpush.bf16.msra.mxu0 0
      %1722 = vmatpush.bf16.msra.mxu0 0
      %1723 = vmatpush.bf16.msra.mxu0 %v1687
      %1724 = vmatpush.bf16.msra.mxu0 %v1686
      %1725 = vmatmul.bf16.gmra.mxu0 %v1691
      %v1726 = vpop.f32.mrf.mxu0
      %v1727 = vadd.f32 %v1634, %v1726
      %v1728 = vpop.f32.mrf.mxu0
      %v1729 = vadd.f32 %v1636, %v1728
      %1730 = vmatmul.bf16.gmra.mxu0 %v1694
      %v1731 = vpop.f32.mrf.mxu0
      %v1732 = vadd.f32 %v1639, %v1731
      %v1733 = vpop.f32.mrf.mxu0
      %v1734 = vadd.f32 %v1641, %v1733
      %1735 = vmatmul.bf16.gmra.mxu0 %v1697
      %v1736 = vpop.f32.mrf.mxu0
      %v1737 = vadd.f32 %v1644, %v1736
      %v1738 = vpop.f32.mrf.mxu0
      %v1739 = vadd.f32 %v1646, %v1738
      %1740 = vmatmul.bf16.gmra.mxu0 %v1700
      %v1741 = vpop.f32.mrf.mxu0
      %v1742 = vadd.f32 %v1649, %v1741
      %v1743 = vpop.f32.mrf.mxu0
      %v1744 = vadd.f32 %v1651, %v1743
      %1745 = vmatmul.bf16.gmra.mxu0 %v1703
      %v1746 = vpop.f32.mrf.mxu0
      %v1747 = vadd.f32 %v1654, %v1746
      %v1748 = vpop.f32.mrf.mxu0
      %v1749 = vadd.f32 %v1656, %v1748
      %1750 = vmatmul.bf16.gmra.mxu0 %v1706
      %v1751 = vpop.f32.mrf.mxu0
      %v1752 = vadd.f32 %v1659, %v1751
      %v1753 = vpop.f32.mrf.mxu0
      %v1754 = vadd.f32 %v1661, %v1753
      %1755 = vmatmul.bf16.gmra.mxu0 %v1709
      %v1756 = vpop.f32.mrf.mxu0
      %v1757 = vadd.f32 %v1664, %v1756
      %v1758 = vpop.f32.mrf.mxu0
      %v1759 = vadd.f32 %v1666, %v1758
      %1760 = vmatmul.bf16.gmra.mxu0 %v1712
      %v1761 = vpop.f32.mrf.mxu0
      %v1762 = vadd.f32 %v1669, %v1761
      %v1763 = vpop.f32.mrf.mxu0
      %v1764 = vadd.f32 %v1671, %v1763
      %1765 = vmatmul.bf16.gmra.mxu0 %v1715
      %v1766 = vpop.f32.mrf.mxu0
      %v1767 = vadd.f32 %v1674, %v1766
      %v1768 = vpop.f32.mrf.mxu0
      %v1769 = vadd.f32 %v1676, %v1768
      %1770 = vdwg.mxu0
      %v1771 = vld [vmem:[%s12] sm:$0x1]
      %v1773 = vperm.slane %v1771, 0
      %v1775 = vadd.f32 %v1727, %v1773
      %v1776 = vadd.f32 %v1729, %v1773
      %v1777 = vadd.f32 %v1732, %v1773
      %v1778 = vadd.f32 %v1734, %v1773
      %v1779 = vadd.f32 %v1737, %v1773
      %v1780 = vadd.f32 %v1739, %v1773
      %v1781 = vadd.f32 %v1742, %v1773
      %v1782 = vadd.f32 %v1744, %v1773
      %v1783 = vadd.f32 %v1747, %v1773
      %v1784 = vadd.f32 %v1749, %v1773
      %v1785 = vadd.f32 %v1752, %v1773
      %v1786 = vadd.f32 %v1754, %v1773
      %v1787 = vadd.f32 %v1757, %v1773
      %v1788 = vadd.f32 %v1759, %v1773
      %v1789 = vadd.f32 %v1762, %v1773
      %v1790 = vadd.f32 %v1764, %v1773
      %v1791 = vadd.f32 %v1767, %v1773
      %v1792 = vadd.f32 %v1769, %v1773
      %v1793 = vmax.f32 %v1775, 0.0
      %v1794 = vmax.f32 %v1776, 0.0
      %v1795 = vmax.f32 %v1777, 0.0
      %v1796 = vmax.f32 %v1778, 0.0
      %v1797 = vmax.f32 %v1779, 0.0
      %v1798 = vmax.f32 %v1780, 0.0
      %v1799 = vmax.f32 %v1781, 0.0
      %v1800 = vmax.f32 %v1782, 0.0
      %v1801 = vmax.f32 %v1783, 0.0
      %v1802 = vmax.f32 %v1784, 0.0
      %v1803 = vmax.f32 %v1785, 0.0
      %v1804 = vmax.f32 %v1786, 0.0
      %v1805 = vmax.f32 %v1787, 0.0
      %v1806 = vmax.f32 %v1788, 0.0
      %v1807 = vmax.f32 %v1789, 0.0
      %v1808 = vmax.f32 %v1790, 0.0
      %v1809 = vmax.f32 %v1791, 0.0
      %v1810 = vmax.f32 %v1792, 0.0
      %v1811 = vpack.c.bf16 %v1793, %v1793
      %v1812 = vpack.c.bf16 %v1794, %v1794
      %v1813 = vpack.c.bf16 %v1795, %v1795
      %v1814 = vpack.c.bf16 %v1796, %v1796
      %v1815 = vpack.c.bf16 %v1797, %v1797
      %v1816 = vpack.c.bf16 %v1798, %v1798
      %v1817 = vpack.c.bf16 %v1799, %v1799
      %v1818 = vpack.c.bf16 %v1800, %v1800
      %v1819 = vpack.c.bf16 %v1801, %v1801
      %v1820 = vpack.c.bf16 %v1802, %v1802
      %v1821 = vpack.c.bf16 %v1803, %v1803
      %v1822 = vpack.c.bf16 %v1804, %v1804
      %v1823 = vpack.c.bf16 %v1805, %v1805
      %v1824 = vpack.c.bf16 %v1806, %v1806
      %v1825 = vpack.c.bf16 %v1807, %v1807
      %v1826 = vpack.c.bf16 %v1808, %v1808
      %v1827 = vpack.c.bf16 %v1809, %v1809
      %v1828 = vpack.c.bf16 %v1810, %v1810
      %1829 = vst.msk [vmem:[%s529] sm:$0xf] %vm693, %v1811
      %1830 = vst.msk [vmem:[%s529 + $0x4] sm:$0xf] %vm693, %v1812
      %1831 = vst.msk [vmem:[%s529 + $0x8] sm:$0xf] %vm693, %v1813
      %1832 = vst.msk [vmem:[%s529 + $0xc] sm:$0xf] %vm693, %v1814
      %1833 = vst.msk [vmem:[%s529 + $0x10] sm:$0xf] %vm693, %v1815
      %1834 = vst.msk [vmem:[%s529 + $0x14] sm:$0xf] %vm693, %v1816
      %1835 = vst.msk [vmem:[%s529 + $0x18] sm:$0xf] %vm693, %v1817
      %1836 = vst.msk [vmem:[%s529 + $0x1c] sm:$0xf] %vm693, %v1818
      %1837 = vst.msk [vmem:[%s529 + $0x20] sm:$0xf] %vm693, %v1819
      %1838 = vst.msk [vmem:[%s529 + $0x24] sm:$0xf] %vm693, %v1820
      %1839 = vst.msk [vmem:[%s529 + $0x28] sm:$0xf] %vm693, %v1821
      %1840 = vst.msk [vmem:[%s529 + $0x2c] sm:$0xf] %vm693, %v1822
      %1841 = vst.msk [vmem:[%s529 + $0x30] sm:$0xf] %vm693, %v1823
      %1842 = vst.msk [vmem:[%s529 + $0x34] sm:$0xf] %vm693, %v1824
      %1843 = vst.msk [vmem:[%s529 + $0x38] sm:$0xf] %vm693, %v1825
      %1844 = vst.msk [vmem:[%s529 + $0x3c] sm:$0xf] %vm693, %v1826
      %1845 = vst.msk [vmem:[%s529 + $0x40] sm:$0xf] %vm693, %v1827
      %1846 = vst.msk [vmem:[%s529 + $0x44] sm:$0xf] %vm693, %v1828
      %p1847 = scmp.lt.s32.totalorder %s27, 1
      %s1848 = scalar_select %p1847, %s27, 1
      %s1849 = smul.addr %s1848, 18
      %s1850 = smul.addr %s1849, 4
      %s1851 = scalar_lea.vmem %s13, %s1850
      %p1852 = scmp.lt.s32.totalorder %s27, 1
      %s1853 = scalar_select %p1852, %s27, 1
      %s1854 = smul.addr %s1853, 16
      %s1855 = smul.addr %s1854, 4
      %s1856 = scalar_lea.vmem %s14, %s1855
      %p1857 = scmp.lt.s32.totalorder %s27, 1
      %s1858 = scalar_select %p1857, %s27, 1
      %s1859 = smul.addr %s1858, 18
      %s1860 = smul.addr %s1859, 4
      %s1861 = scalar_lea.vmem %s15, %s1860
      // Predicated region
      $region73: #{tpu_custom_call.1} parent=71 // pred_check
        %p1862 = pneg %p328
      $region74: #{tpu_custom_call.1} parent=71 // pred_check_branch
        %1864 = sbr.rel (%p1862) target = $region76
      $region75: #{tpu_custom_call.1} parent=71 // pred_region
        _
      $region76: #{tpu_custom_call.1} parent=71 // pred_fallthru
        _
      // Predicated region
      $region77: #{tpu_custom_call.1} parent=71 // pred_check
        %p1865 = pneg %p354
      $region78: #{tpu_custom_call.1} parent=71 // pred_check_branch
        %1867 = sbr.rel (%p1865) target = $region80
      $region79: #{tpu_custom_call.1} parent=71 // pred_region
        _
      $region80: #{tpu_custom_call.1} parent=71 // pred_fallthru
        _
      // Predicated region
      $region81: #{tpu_custom_call.1} parent=71 // pred_check
        %p1868 = pneg %p380
      $region82: #{tpu_custom_call.1} parent=71 // pred_check_branch
        %1870 = sbr.rel (%p1868) target = $region84
      $region83: #{tpu_custom_call.1} parent=71 // pred_region
        _
      $region84: #{tpu_custom_call.1} parent=71 // pred_fallthru
        _
    $region72: #{tpu_custom_call.1} parent=5 // pred_fallthru
      _
    %p1871 = scmp.le.s32.totalorder 2, %s22
    // Predicated region
    $region85: #{tpu_custom_call.1} parent=5 // pred_check
      %p1872 = pneg %p1871
    $region86: #{tpu_custom_call.1} parent=5 // pred_check_branch
      %1874 = sbr.rel (%p1872) target = $region88
    $region87: #{tpu_custom_call.1} parent=5 // pred_region
      %s1875 = ssub.s32 %s22, 2
      // Predicated region
      $region89: #{tpu_custom_call.1} parent=87 // pred_check
        %p1876 = pneg %p334
      $region90: #{tpu_custom_call.1} parent=87 // pred_check_branch
        %1878 = sbr.rel (%p1876) target = $region92
      $region91: #{tpu_custom_call.1} parent=87 // pred_region
        %p1879 = scmp.lt.s32.totalorder %s28, 1
        %s1880 = scalar_select %p1879, %s28, 1
        %s1881 = smul.addr %s1880, 18
        %s1882 = smul.addr %s1881, 4
        %s1883 = scalar_lea.vmem %s13, %s1882
      $region92: #{tpu_custom_call.1} parent=87 // pred_fallthru
        _
      // Predicated region
      $region93: #{tpu_custom_call.1} parent=87 // pred_check
        %p1884 = pneg %p360
      $region94: #{tpu_custom_call.1} parent=87 // pred_check_branch
        %1886 = sbr.rel (%p1884) target = $region96
      $region95: #{tpu_custom_call.1} parent=87 // pred_region
        %p1887 = scmp.lt.s32.totalorder %s28, 1
        %s1888 = scalar_select %p1887, %s28, 1
        %s1889 = smul.addr %s1888, 16
        %s1890 = smul.addr %s1889, 4
        %s1891 = scalar_lea.vmem %s14, %s1890
      $region96: #{tpu_custom_call.1} parent=87 // pred_fallthru
        _
      // Predicated region
      $region97: #{tpu_custom_call.1} parent=87 // pred_check
        %p1892 = pneg %p386
      $region98: #{tpu_custom_call.1} parent=87 // pred_check_branch
        %1894 = sbr.rel (%p1892) target = $region100
      $region99: #{tpu_custom_call.1} parent=87 // pred_region
        %p1895 = scmp.lt.s32.totalorder %s28, 1
        %s1896 = scalar_select %p1895, %s28, 1
        %s1897 = smul.addr %s1896, 18
        %s1898 = smul.addr %s1897, 4
        %s1899 = scalar_lea.vmem %s15, %s1898
      $region100: #{tpu_custom_call.1} parent=87 // pred_fallthru
        _
    $region88: #{tpu_custom_call.1} parent=5 // pred_fallthru
      _
  $region6: #{tpu_custom_call.1} parent=0 // loop_footer
    %s26 = sadd.s32 1, %s22
  $region7: #{tpu_custom_call.1} parent=0 // loop_footer_branch
    %21 = sbr.rel target = $region3
  $region8: #{tpu_custom_call.1} parent=0 // loop_exit
    _

</llo_original>
